<compile_context>
chip_gen: v6e
topology: v6e:2x2x1
jax: 0.10.0
libtpu: 0.0.40
codegen_flags: <defaults>
</compile_context>

<pallas_src>
import functools

import jax
import jax.numpy as jnp
from jax.experimental import pallas as pl
from jax.experimental.pallas import tpu as pltpu

DROPOUT_P = 0.2
VMEM_LIMIT_BYTES = 32 * 1024 * 1024


def _compiler_params():
    return pltpu.CompilerParams(dimension_semantics=("parallel",),
                                vmem_limit_bytes=VMEM_LIMIT_BYTES)


# ---------------------------------------------------------------------------
# Dropout keep-mask: 2 int32 vector multiplies + 1 logical xorshift on absolute
# (row, col) indices; the scalar salt (batch, seed) is hoisted out of the
# per-element math.  Deterministic, tiling-invariant, pure VPU int ops.
# ---------------------------------------------------------------------------
def _dropout_keep_mask(shape, salt, p):
    r = jax.lax.broadcasted_iota(jnp.int32, shape, 0)
    c = jax.lax.broadcasted_iota(jnp.int32, shape, 1)
    h = r * jnp.int32(-1640531527) + c + salt            # 0x9E3779B9
    h = h ^ ((h >> 15) & jnp.int32(0x1FFFF))             # logical xorshift (int32-safe)
    h = h * jnp.int32(0x27D4EB2F)
    thresh = jnp.int32(int(round(p * 4294967296.0)) - 2147483648)
    return h >= thresh


# ---------------------------------------------------------------------------
# Causal attention over one head with deferred softmax normalization:
#   o = (select(causal & keep, exp(s - m), 0) @ v) * recip(rowsum) * 1/(1-p)
# q, k, v: (T, hs) bf16; returns (T, hs) f32.
# ---------------------------------------------------------------------------
def _causal_attention(q, k, v, *, scale, dropout_p, apply_dropout, salt):
    T = q.shape[0]
    s = jax.lax.dot_general(q, k, (((1,), (1,)), ((), ())),
                            preferred_element_type=jnp.float32) * scale
    row = jax.lax.broadcasted_iota(jnp.int32, (T, T), 0)
    col = jax.lax.broadcasted_iota(jnp.int32, (T, T), 1)
    s = jnp.where(row >= col, s, -jnp.inf)               # single causal select
    m = jnp.max(s, axis=-1, keepdims=True)
    p = jnp.exp(s - m)                                    # masked entries -> exp(-inf) = 0
    denom = jnp.sum(p, axis=-1, keepdims=True)            # >= 1 (diagonal term)
    inv = pl.reciprocal(denom, approx=True)                # EUP, off the VALU slot
    if apply_dropout:
        keep = _dropout_keep_mask((T, T), salt, dropout_p)
        p = jnp.where(keep, p, 0.0)
        inv = inv * (1.0 / (1.0 - dropout_p))              # folded into per-row scale
    o = jnp.dot(p.astype(jnp.bfloat16), v, preferred_element_type=jnp.float32)
    return o * inv


# ---------------------------------------------------------------------------
# Fused kernel: sa head + ca head ([xz, new_cache] via split weights) + blend.
# Grid over batch; only the first Tp (= ceil8(T)) rows are computed.
# ---------------------------------------------------------------------------
def _attn_blend_kernel(sr_ref, x_ref, nc_ref, w_sa_ref, w_cax_ref, w_cac_ref, o_ref, *,
                       hs_sa, hs_ca, dropout_p, apply_dropout, seed):
    b = pl.program_id(0)
    x = x_ref[...]                                        # (Tp, C)  bf16
    nc = nc_ref[...]                                      # (Tp, D)  bf16

    # sa head: single fused QKV projection (C, 3*hs).
    qkv = jnp.dot(x, w_sa_ref[...],
                  preferred_element_type=jnp.float32).astype(jnp.bfloat16)
    q, k, v = qkv[:, :hs_sa], qkv[:, hs_sa:2 * hs_sa], qkv[:, 2 * hs_sa:]
    salt_sa = (b + jnp.int32(seed)) * jnp.int32(-1028477387)
    sa = _causal_attention(q, k, v, scale=float(hs_sa) ** -0.5,
                           dropout_p=dropout_p, apply_dropout=apply_dropout,
                           salt=salt_sa)

    # ca head on [xz, new_cache]: cat-matmul expressed as two split matmuls.
    qkv_c = (jnp.dot(x, w_cax_ref[...], preferred_element_type=jnp.float32)
             + jnp.dot(nc, w_cac_ref[...], preferred_element_type=jnp.float32)
             ).astype(jnp.bfloat16)
    qc, kc, vc = qkv_c[:, :hs_ca], qkv_c[:, hs_ca:2 * hs_ca], qkv_c[:, 2 * hs_ca:]
    salt_ca = (b + jnp.int32(seed + 1)) * jnp.int32(-1028477387)
    ca = _causal_attention(qc, kc, vc, scale=float(hs_ca) ** -0.5,
                           dropout_p=dropout_p, apply_dropout=apply_dropout,
                           salt=salt_ca)

    sr = sr_ref[...]                                      # (1, 1), broadcasts
    o_ref[...] = (sr * ca + (1.0 - sr) * sa).astype(o_ref.dtype)


def fused_attention_blend(xq, ncq, sr, w_sa, w_cax, w_cac, out_dtype, *,
                          dropout_p, training, seed):
    B, Tp, C = xq.shape
    D = ncq.shape[-1]
    hs_sa = w_sa.shape[-1] // 3
    hs_ca = w_cac.shape[-1] // 3
    kernel = functools.partial(
        _attn_blend_kernel, hs_sa=hs_sa, hs_ca=hs_ca, dropout_p=dropout_p,
        apply_dropout=bool(training) and dropout_p > 0.0, seed=int(seed))
    return pl.pallas_call(
        kernel,
        out_shape=jax.ShapeDtypeStruct((B, Tp, hs_ca), out_dtype),
        grid=(B,),
        in_specs=[pl.BlockSpec((1, 1), lambda b: (0, 0)),
                  pl.BlockSpec((None, Tp, C), lambda b: (b, 0, 0)),
                  pl.BlockSpec((None, Tp, D), lambda b: (b, 0, 0)),
                  pl.BlockSpec((C, 3 * hs_sa), lambda b: (0, 0)),
                  pl.BlockSpec((C, 3 * hs_ca), lambda b: (0, 0)),
                  pl.BlockSpec((D, 3 * hs_ca), lambda b: (0, 0))],
        out_specs=pl.BlockSpec((None, Tp, hs_ca), lambda b: (b, 0, 0)),
        compiler_params=_compiler_params(),
    )(sr.reshape(1, 1).astype(jnp.float32), xq, ncq, w_sa, w_cax, w_cac)


# ---------------------------------------------------------------------------
# GRU-style cache update: all cat([xz, cache]) @ W matmuls fused into three dots.
# ---------------------------------------------------------------------------
def _gate_kernel(x_ref, c_ref, wx3_ref, wc2_ref, wcc_ref, b3_ref, o_ref, *, D):
    x = x_ref[...]                                        # (tm, C) bf16
    c = c_ref[...]                                        # (tm, D) f32 (elementwise use)
    cb = c.astype(jnp.bfloat16)

    xw = jnp.dot(x, wx3_ref[...], preferred_element_type=jnp.float32) + b3_ref[...]
    cw = jnp.dot(cb, wc2_ref[...], preferred_element_type=jnp.float32)
    g = jax.nn.sigmoid(xw[:, :2 * D] + cw)                # [gu | gr]
    gu = g[:, :D]
    gr = g[:, D:]

    rc = (gr * c).astype(jnp.bfloat16)
    cand = xw[:, 2 * D:] + jnp.dot(rc, wcc_ref[...], preferred_element_type=jnp.float32)
    o_ref[...] = ((1.0 - gu) * c + gu * cand).astype(o_ref.dtype)


def _pick_tm(M):
    # Largest tile in [8, 1024] that divides M (no wrapper pad copy), preferring >= 2
    # tiles so megacore / BlockSpec pipelining have work to overlap.
    for t in (1024, 768, 512, 448, 384, 320, 256, 192, 128, 64, 32, 16, 8):
        if M % t == 0 and M // t >= 2:
            return t
    for t in (1024, 768, 512, 384, 256, 128, 64, 32, 16, 8):
        if M % t == 0:
            return t
    return 256  # fallback: pad path


def gate_update(xz_bf16, cache, wu, bu, wr, br, wc, bc, *, tm=None):
    """new_cache = (1-gu)*cache + gu*w_c([xz, gr*cache]); row-tiled over B*S rows."""
    B, S, C = xz_bf16.shape
    D = cache.shape[-1]
    M = B * S
    if tm is None:
        tm = _pick_tm(M)
    num_tiles = pl.cdiv(M, tm)
    Mp = num_tiles * tm

    x2 = xz_bf16.reshape(M, C)
    c2 = cache.reshape(M, D)
    if Mp != M:  # only taken if no divisor tile exists
        x2 = jnp.pad(x2, ((0, Mp - M), (0, 0)))
        c2 = jnp.pad(c2, ((0, Mp - M), (0, 0)))

    # cat([xz, cache]) @ W == xz @ W[:C] + cache @ W[C:]; fuse weights wrapper-side.
    wx3 = jnp.concatenate([wu[:C], wr[:C], wc[:C]], axis=-1).astype(jnp.bfloat16)  # (C,3D)
    wc2 = jnp.concatenate([wu[C:], wr[C:]], axis=-1).astype(jnp.bfloat16)          # (D,2D)
    wcc = wc[C:].astype(jnp.bfloat16)                                              # (D,D)
    b3 = jnp.concatenate([bu, br, bc]).reshape(1, 3 * D).astype(jnp.float32)

    out = pl.pallas_call(
        functools.partial(_gate_kernel, D=D),
        out_shape=jax.ShapeDtypeStruct((Mp, D), cache.dtype),
        grid=(num_tiles,),
        in_specs=[pl.BlockSpec((tm, C), lambda i: (i, 0)),
                  pl.BlockSpec((tm, D), lambda i: (i, 0)),
                  pl.BlockSpec((C, 3 * D), lambda i: (0, 0)),
                  pl.BlockSpec((D, 2 * D), lambda i: (0, 0)),
                  pl.BlockSpec((D, D), lambda i: (0, 0)),
                  pl.BlockSpec((1, 3 * D), lambda i: (0, 0))],
        out_specs=pl.BlockSpec((tm, D), lambda i: (i, 0)),
        compiler_params=_compiler_params(),
    )(x2, c2, wx3, wc2, wcc, b3)

    return out[:M].reshape(B, S, D)


# ---------------------------------------------------------------------------
# Functional GRCHead forward.
# ---------------------------------------------------------------------------
def grc_head_forward(x, params, cache, *, block_size, training=True, seed=0,
                     dropout_p=DROPOUT_P, tm=None):
    """Returns (out[:, :T, :], new_cache)."""
    B, T, C = x.shape

    # xz only ever feeds matmuls -> build it directly in bf16 (halves HBM traffic).
    xz_bf16 = jnp.concatenate(
        [jnp.zeros((B, block_size - T, C), jnp.bfloat16), x.astype(jnp.bfloat16)],
        axis=1)                                                        # (B, S, C)

    new_cache = gate_update(xz_bf16, cache, params["wu"], params["bu"],
                            params["wr"], params["br"],
                            params["wc"], params["bc"], tm=tm)

    # Module returns (...)[:, :T, :] (prefix rows); causality means rows < T never
    # attend past row T-1, so both heads only need the first Tp rows/keys.
    Tp = min(block_size, max(8, -(-T // 8) * 8))
    xq = xz_bf16[:, :Tp, :]
    ncq = new_cache[:, :Tp, :].astype(jnp.bfloat16)

    w_sa = jnp.concatenate([params["sa_wq"], params["sa_wk"], params["sa_wv"]],
                           axis=-1).astype(jnp.bfloat16)               # (C, 3*hs)
    w_cax = jnp.concatenate([params["ca_wq"][:C], params["ca_wk"][:C],
                             params["ca_wv"][:C]], axis=-1).astype(jnp.bfloat16)
    w_cac = jnp.concatenate([params["ca_wq"][C:], params["ca_wk"][C:],
                             params["ca_wv"][C:]], axis=-1).astype(jnp.bfloat16)

    sr = jax.nn.sigmoid(params["ratio"].astype(jnp.float32))
    out = fused_attention_blend(xq, ncq, sr, w_sa, w_cax, w_cac, x.dtype,
                                dropout_p=dropout_p, training=training, seed=seed)
    return out[:, :T, :], new_cache


# ---------------------------------------------------------------------------
# Pure-JAX reference (dropout off) and parameter init.
# ---------------------------------------------------------------------------
def _head_reference(x, wq, wk, wv):
    q, k, v = x @ wq, x @ wk, x @ wv
    S = x.shape[1]
    wei = jnp.einsum("bqd,bkd->bqk", q, k) * (k.shape[-1] ** -0.5)
    tril = jnp.tril(jnp.ones((S, S), dtype=bool))
    wei = jnp.where(tril, wei, -jnp.inf)
    wei = jax.nn.softmax(wei, axis=-1)
    return jnp.einsum("bqk,bkd->bqd", wei, v)


def grc_head_reference(x, params, cache, *, block_size):
    B, T, C = x.shape
    z = jnp.zeros((B, block_size - T, C), x.dtype)
    xz = jnp.concatenate([z, x], axis=1)
    sa = _head_reference(xz, params["sa_wq"], params["sa_wk"], params["sa_wv"])
    xt1 = jnp.concatenate([xz, cache], axis=-1)
    gu = jax.nn.sigmoid(xt1 @ params["wu"] + params["bu"])
    gr = jax.nn.sigmoid(xt1 @ params["wr"] + params["br"])
    xt2 = jnp.concatenate([xz, gr * cache], axis=-1)
    new_cache = (1.0 - gu) * cache + gu * (xt2 @ params["wc"] + params["bc"])
    ca = _head_reference(jnp.concatenate([xz, new_cache], axis=-1),
                         params["ca_wq"], params["ca_wk"], params["ca_wv"])
    sr = jax.nn.sigmoid(params["ratio"])
    return (sr * ca + (1.0 - sr) * sa)[:, :T, :], new_cache


def init_params(key, n_embd, head_size, dtype=jnp.float32):
    cache_dim = head_size
    d2 = n_embd + cache_dim
    kk = iter(jax.random.split(key, 16))

    def w(fan_in, fan_out):
        lim = 1.0 / (fan_in ** 0.5)
        return jax.random.uniform(next(kk), (fan_in, fan_out), dtype, -lim, lim)

    def b(fan_in, fan_out):
        lim = 1.0 / (fan_in ** 0.5)
        return jax.random.uniform(next(kk), (fan_out,), dtype, -lim, lim)

    return {
        "sa_wk": w(n_embd, head_size), "sa_wq": w(n_embd, head_size),
        "sa_wv": w(n_embd, head_size),
        "ca_wk": w(d2, cache_dim), "ca_wq": w(d2, cache_dim), "ca_wv": w(d2, cache_dim),
        "wr": w(d2, cache_dim), "br": b(d2, cache_dim),
        "wu": w(d2, cache_dim), "bu": b(d2, cache_dim),
        "wc": w(d2, cache_dim), "bc": b(d2, cache_dim),
        "ratio": jnp.zeros((), dtype),        # module init: nn.Parameter(tensor(0.0))
    }


if __name__ == "__main__":
    # Small lane-aligned stand-ins for the module's block_size=768, n_embd=384.
    BLOCK_SIZE = 256
    N_EMBD = 128
    HEAD_SIZE = 128        # cache_dim == head_size
    B, T = 2, 8

    key = jax.random.PRNGKey(0)
    kx, kp = jax.random.split(key)
    x = jax.random.normal(kx, (B, T, N_EMBD), jnp.float32)
    params = init_params(kp, N_EMBD, HEAD_SIZE)
    cache0 = jnp.zeros((B, BLOCK_SIZE, HEAD_SIZE), jnp.float32)   # fresh gr_cache

    # Step 1: training pass (dropout on the attention probabilities) from zero cache.
    y_train, cache1 = grc_head_forward(x, params, cache0, block_size=BLOCK_SIZE,
                                       training=True, seed=0)
    y_train = jax.block_until_ready(y_train)
    assert y_train.shape == (B, T, HEAD_SIZE) and y_train.dtype == x.dtype
    assert bool(jnp.all(jnp.isfinite(y_train)))

    # Step 2: recurrent step with the non-zero cache, dropout off, vs JAX reference
    # (exercises the cache-side gate matmuls and the ca head on a non-zero cache).
    y_eval, cache2 = grc_head_forward(x, params, cache1, block_size=BLOCK_SIZE,
                                      training=False, seed=0)
    y_eval = jax.block_until_ready(y_eval)
    y_ref, cache2_ref = grc_head_reference(x, params, cache1, block_size=BLOCK_SIZE)
    # bf16 MXU operands with f32 accumulation -> loose-ish tolerance.
    assert jnp.allclose(y_eval, y_ref, atol=5e-2, rtol=5e-2), \
        float(jnp.max(jnp.abs(y_eval - y_ref)))
    assert jnp.allclose(cache2, cache2_ref, atol=5e-2, rtol=5e-2), \
        float(jnp.max(jnp.abs(cache2 - cache2_ref)))

    print("KERNEL_OK")
</pallas_src>

<mosaic_0001>
module attributes {stable_mosaic.version = 11 : i64} {
  func.func @_gate_kernel(%arg0: i32, %arg1: memref<256x128xbf16, #tpu.memory_space<vmem>>, %arg2: memref<256x128xf32, #tpu.memory_space<vmem>>, %arg3: memref<128x384xbf16, #tpu.memory_space<vmem>>, %arg4: memref<128x256xbf16, #tpu.memory_space<vmem>>, %arg5: memref<128x128xbf16, #tpu.memory_space<vmem>>, %arg6: memref<1x384xf32, #tpu.memory_space<vmem>>, %arg7: memref<256x128xf32, #tpu.memory_space<vmem>>) attributes {dimension_semantics = [#tpu.dimension_semantics<parallel>], iteration_bounds = array<i64: 2>, scalar_prefetch = 0 : i64, scratch_operands = 0 : i64, tpu.core_type = #tpu.core_type<tc>, window_params = [{transform_indices = @transform_0, window_bounds = array<i64: 256, 128>}, {transform_indices = @transform_1, window_bounds = array<i64: 256, 128>}, {pipeline_mode = #tpu.pipeline_mode<synchronous>, transform_indices = @transform_2, window_bounds = array<i64: 128, 384>}, {pipeline_mode = #tpu.pipeline_mode<synchronous>, transform_indices = @transform_3, window_bounds = array<i64: 128, 256>}, {pipeline_mode = #tpu.pipeline_mode<synchronous>, transform_indices = @transform_4, window_bounds = array<i64: 128, 128>}, {pipeline_mode = #tpu.pipeline_mode<synchronous>, transform_indices = @transform_5, window_bounds = array<i64: 1, 384>}, {transform_indices = @transform_6, window_bounds = array<i64: 256, 128>}]} {
    %c0 = arith.constant 0 : index
    %c0_0 = arith.constant 0 : index
    %0 = vector.load %arg1[%c0, %c0_0] : memref<256x128xbf16, #tpu.memory_space<vmem>>, vector<256x128xbf16>
    %c0_1 = arith.constant 0 : index
    %c0_2 = arith.constant 0 : index
    %1 = vector.load %arg2[%c0_1, %c0_2] : memref<256x128xf32, #tpu.memory_space<vmem>>, vector<256x128xf32>
    %2 = arith.truncf %1 : vector<256x128xf32> to vector<256x128xbf16>
    %c0_3 = arith.constant 0 : index
    %c0_4 = arith.constant 0 : index
    %3 = vector.load %arg3[%c0_3, %c0_4] : memref<128x384xbf16, #tpu.memory_space<vmem>>, vector<128x384xbf16>
    %cst = arith.constant dense<0.000000e+00> : vector<256x384xf32>
    %4 = tpu.matmul %0, %3, %cst {dimension_numbers = #tpu.dot_dimension_numbers<[1], [0], [0], [1], [0, 0, 1, 1], [], []>} : vector<256x128xbf16>, vector<128x384xbf16>, vector<256x384xf32> -> vector<256x384xf32>
    %c0_5 = arith.constant 0 : index
    %c0_6 = arith.constant 0 : index
    %5 = vector.load %arg6[%c0_5, %c0_6] : memref<1x384xf32, #tpu.memory_space<vmem>>, vector<1x384xf32>
    %6 = vector.broadcast %5 : vector<1x384xf32> to vector<256x384xf32>
    %7 = arith.addf %4, %6 : vector<256x384xf32>
    %c0_7 = arith.constant 0 : index
    %c0_8 = arith.constant 0 : index
    %8 = vector.load %arg4[%c0_7, %c0_8] : memref<128x256xbf16, #tpu.memory_space<vmem>>, vector<128x256xbf16>
    %cst_9 = arith.constant dense<0.000000e+00> : vector<256x256xf32>
    %9 = tpu.matmul %2, %8, %cst_9 {dimension_numbers = #tpu.dot_dimension_numbers<[1], [0], [0], [1], [0, 0, 1, 1], [], []>} : vector<256x128xbf16>, vector<128x256xbf16>, vector<256x256xf32> -> vector<256x256xf32>
    %10 = vector.extract_strided_slice %7 {offsets = [0, 0], sizes = [256, 256], strides = [1, 1]} : vector<256x384xf32> to vector<256x256xf32>
    %11 = arith.addf %10, %9 : vector<256x256xf32>
    %12 = arith.negf %11 : vector<256x256xf32>
    %13 = math.exp %12 : vector<256x256xf32>
    %cst_10 = arith.constant 1.000000e+00 : f32
    %14 = vector.broadcast %cst_10 : f32 to vector<256x256xf32>
    %15 = arith.addf %14, %13 : vector<256x256xf32>
    %16 = arith.divf %14, %15 : vector<256x256xf32>
    %17 = vector.extract_strided_slice %16 {offsets = [0, 0], sizes = [256, 128], strides = [1, 1]} : vector<256x256xf32> to vector<256x128xf32>
    %18 = vector.extract_strided_slice %16 {offsets = [0, 128], sizes = [256, 128], strides = [1, 1]} : vector<256x256xf32> to vector<256x128xf32>
    %19 = arith.mulf %18, %1 : vector<256x128xf32>
    %20 = arith.truncf %19 : vector<256x128xf32> to vector<256x128xbf16>
    %21 = vector.extract_strided_slice %7 {offsets = [0, 256], sizes = [256, 128], strides = [1, 1]} : vector<256x384xf32> to vector<256x128xf32>
    %c0_11 = arith.constant 0 : index
    %c0_12 = arith.constant 0 : index
    %22 = vector.load %arg5[%c0_11, %c0_12] : memref<128x128xbf16, #tpu.memory_space<vmem>>, vector<128x128xbf16>
    %cst_13 = arith.constant dense<0.000000e+00> : vector<256x128xf32>
    %23 = tpu.matmul %20, %22, %cst_13 {dimension_numbers = #tpu.dot_dimension_numbers<[1], [0], [0], [1], [0, 0, 1, 1], [], []>} : vector<256x128xbf16>, vector<128x128xbf16>, vector<256x128xf32> -> vector<256x128xf32>
    %24 = arith.addf %21, %23 : vector<256x128xf32>
    %cst_14 = arith.constant 1.000000e+00 : f32
    %25 = vector.broadcast %cst_14 : f32 to vector<256x128xf32>
    %26 = arith.subf %25, %17 : vector<256x128xf32>
    %27 = arith.mulf %26, %1 : vector<256x128xf32>
    %28 = arith.mulf %17, %24 : vector<256x128xf32>
    %29 = arith.addf %27, %28 : vector<256x128xf32>
    %c0_15 = arith.constant 0 : index
    %c0_16 = arith.constant 0 : index
    %30 = vector.load %arg7[%c0_15, %c0_16] : memref<256x128xf32, #tpu.memory_space<vmem>>, vector<256x128xf32>
    tpu.vector_store %arg7[%c0_15, %c0_16], %29 {strides = array<i32>} : memref<256x128xf32, #tpu.memory_space<vmem>>, vector<256x128xf32>,
    return
  }
  func.func @transform_0(%arg0: i32) -> (i32, i32) {
    %c0_i32 = arith.constant 0 : i32
    %c0_i32_0 = arith.constant 0 : i32
    return %arg0, %c0_i32 : i32, i32
  }
  func.func @transform_1(%arg0: i32) -> (i32, i32) {
    %c0_i32 = arith.constant 0 : i32
    %c0_i32_0 = arith.constant 0 : i32
    return %arg0, %c0_i32 : i32, i32
  }
  func.func @transform_2(%arg0: i32) -> (i32, i32) {
    %c0_i32 = arith.constant 0 : i32
    %c0_i32_0 = arith.constant 0 : i32
    %c0_i32_1 = arith.constant 0 : i32
    return %c0_i32, %c0_i32_0 : i32, i32
  }
  func.func @transform_3(%arg0: i32) -> (i32, i32) {
    %c0_i32 = arith.constant 0 : i32
    %c0_i32_0 = arith.constant 0 : i32
    %c0_i32_1 = arith.constant 0 : i32
    return %c0_i32, %c0_i32_0 : i32, i32
  }
  func.func @transform_4(%arg0: i32) -> (i32, i32) {
    %c0_i32 = arith.constant 0 : i32
    %c0_i32_0 = arith.constant 0 : i32
    %c0_i32_1 = arith.constant 0 : i32
    return %c0_i32, %c0_i32_0 : i32, i32
  }
  func.func @transform_5(%arg0: i32) -> (i32, i32) {
    %c0_i32 = arith.constant 0 : i32
    %c0_i32_0 = arith.constant 0 : i32
    %c0_i32_1 = arith.constant 0 : i32
    return %c0_i32, %c0_i32_0 : i32, i32
  }
  func.func @transform_6(%arg0: i32) -> (i32, i32) {
    %c0_i32 = arith.constant 0 : i32
    %c0_i32_0 = arith.constant 0 : i32
    return %arg0, %c0_i32 : i32, i32
  }
}

</mosaic_0001>

<llo_original>
// kernel: tpu_custom_call.1
$region0: #{tpu_custom_call.1}
  #allocation0 [shape = 'u32[]', space=smem, size = 0x4, offset = 0x4, fixed_abs, tag = 'smem constant byte address 0x4 - core index']
  #allocation1 [shape = 'u32[144,128]{1,0:T(1,128)}', space=vmem, size = 0x12000, scoped, tag = 'internal scratch']
  %s0 = inlined_call_operand.hbm [shape: bf16[512,128], index: 0, kind: input, shape index: {}]
  %s1 = inlined_call_operand.hbm [shape: f32[512,128], index: 1, kind: input, shape index: {}]
  %s2 = inlined_call_operand.hbm [shape: bf16[128,384], index: 2, kind: input, shape index: {}]
  %s3 = inlined_call_operand.hbm [shape: bf16[128,256], index: 3, kind: input, shape index: {}]
  %s4 = inlined_call_operand.hbm [shape: bf16[128,128], index: 4, kind: input, shape index: {}]
  %s5 = inlined_call_operand.vmem [shape: f32[1,384], index: 5, kind: input, shape index: {}]
  %s6 = inlined_call_operand.hbm [shape: f32[512,128], index: 6, kind: output, shape index: {}]
  %s7 = sld [smem:[#allocation0]]
  $region77: #{tpu_custom_call.1} parent=0
    _
  %s9 = ssub.s32 1, %s7
  %s10 = scalar_select 0, %s9, %s7
  $region1: #{tpu_custom_call.1} parent=0
    #allocation2 [shape = 'u8[131072]{0}', space=vmem, size = 0x20000, scoped, tag = 'input window, operand 0']
    #allocation3 [shape = 's32[2]{0}', space=sflag, size = 0x8, scoped, tag = 'scoped memory for tpu_custom_call.1']
    #allocation4 [shape = 's32[2]{0}', space=sflag, size = 0x8, scoped, tag = 'scoped memory for tpu_custom_call.1']
    #allocation5 [shape = 'u8[262144]{0}', space=vmem, size = 0x40000, scoped, tag = 'input window, operand 1']
    #allocation6 [shape = 's32[2]{0}', space=sflag, size = 0x8, scoped, tag = 'scoped memory for tpu_custom_call.1']
    #allocation7 [shape = 'u8[98304]{0}', space=vmem, size = 0x18000, scoped, tag = 'input window, operand 2, single buffered']
    #allocation8 [shape = 'u8[65536]{0}', space=vmem, size = 0x10000, scoped, tag = 'input window, operand 3, single buffered']
    #allocation9 [shape = 's32[1]{0}', space=sflag, size = 0x4, scoped, tag = 'scoped memory for tpu_custom_call.1']
    #allocation10 [shape = 'u8[32768]{0}', space=vmem, size = 0x8000, scoped, tag = 'input window, operand 4, single buffered']
    #allocation11 [shape = 'u8[262144]{0}', space=vmem, size = 0x40000, scoped, tag = 'output window, operand 0']
    %11 = vsyncpa [#allocation3], 0
    %s12 = scalar_lea.sflag [#allocation3], 1
    %13 = vsyncpa %s12, 0
    %14 = vsyncpa [#allocation6], 0
    %s15 = scalar_lea.sflag [#allocation6], 1
    %16 = vsyncpa %s15, 0
    %17 = vsyncpa [#allocation9], 0
    %18 = vsyncpa [#allocation4], 0
    %s19 = scalar_lea.sflag [#allocation4], 1
    %20 = vsyncpa %s19, 0
    loop: start=0, step=1, limit=4
    $region2: #{tpu_custom_call.1} parent=1 // loop_pre_header
      _
    $region3: #{tpu_custom_call.1} parent=1 // loop_header
      %s22 = sphi 0, %s26
      %p23 = scmp.ge.s32.totalorder %s22, 4
      %s32 = sphi 0, %s34
      %s35 = sphi 0, %s32
      %s36 = sphi 0, %s35
      %s52 = sphi 0, %s36
      %s58 = sphi 0, %s60
      %s61 = sphi 0, %s58
      %s62 = sphi 0, %s61
      %s78 = sphi 0, %s62
      %s82 = sphi 0, %s82
      %s84 = sphi 0, %s82
      %s85 = sphi 0, %s84
      %s99 = sphi 0, %s85
      %s103 = sphi 0, %s103
      %s105 = sphi 0, %s103
      %s106 = sphi 0, %s105
      %s120 = sphi 0, %s106
      %s124 = sphi 0, %s124
      %s126 = sphi 0, %s124
      %s127 = sphi 0, %s126
      %s141 = sphi 0, %s127
      %s145 = sphi 0, %s145
      %s147 = sphi 0, %s145
      %s148 = sphi 0, %s147
      %s162 = sphi 0, %s148
      %s168 = sphi 0, %s170
      %s171 = sphi 0, %s168
      %s172 = sphi 0, %s171
      %s188 = sphi 0, %s172
    $region4: #{tpu_custom_call.1} parent=1 // loop_header_branch
      %25 = sbr.rel (%p23) target = $region8
    $region5: #{tpu_custom_call.1} parent=1 // loop_body
      %s27 = ssub.s32 %s22, 1
      %s28 = ssub.s32 %s22, 2
      %s29 = sadd.s32 %s22, 1
      %s30 = ssub.s32 %s22, %s29
      %p31 = scmp.eq.s32.totalorder %s30, 0
      %s33 = sadd.s32 %s32, 1
      %s34 = scalar_select %p31, %s32, %s33
      %p37 = pneg %p31
      %p38 = scmp.eq.s32.totalorder %s22, 1
      %p39 = por %p37, %p38
      %p40 = scmp.ne.s32.totalorder %s32, %s35
      %p41 = scmp.eq.s32.totalorder %s22, 0
      %p42 = por %p40, %p41
      %p43 = scmp.ne.s32.totalorder %s32, %s35
      %p44 = scmp.eq.s32.totalorder %s27, 1
      %p45 = por %p43, %p44
      %p46 = scmp.ne.s32.totalorder %s35, %s36
      %p47 = scmp.eq.s32.totalorder %s27, 0
      %p48 = por %p46, %p47
      %p49 = scmp.ne.s32.totalorder %s35, %s36
      %p50 = scmp.eq.s32.totalorder %s28, 1
      %p51 = por %p49, %p50
      %p53 = scmp.ne.s32.totalorder %s36, %s52
      %p54 = scmp.eq.s32.totalorder %s28, 0
      %p55 = por %p53, %p54
      %s56 = ssub.s32 %s22, %s29
      %p57 = scmp.eq.s32.totalorder %s56, 0
      %s59 = sadd.s32 %s58, 1
      %s60 = scalar_select %p57, %s58, %s59
      %p63 = pneg %p57
      %p64 = scmp.eq.s32.totalorder %s22, 1
      %p65 = por %p63, %p64
      %p66 = scmp.ne.s32.totalorder %s58, %s61
      %p67 = scmp.eq.s32.totalorder %s22, 0
      %p68 = por %p66, %p67
      %p69 = scmp.ne.s32.totalorder %s58, %s61
      %p70 = scmp.eq.s32.totalorder %s27, 1
      %p71 = por %p69, %p70
      %p72 = scmp.ne.s32.totalorder %s61, %s62
      %p73 = scmp.eq.s32.totalorder %s27, 0
      %p74 = por %p72, %p73
      %p75 = scmp.ne.s32.totalorder %s61, %s62
      %p76 = scmp.eq.s32.totalorder %s28, 1
      %p77 = por %p75, %p76
      %p79 = scmp.ne.s32.totalorder %s62, %s78
      %p80 = scmp.eq.s32.totalorder %s28, 0
      %p81 = por %p79, %p80
      %s83 = sadd.s32 %s82, 1
      %p86 = scmp.eq.s32.totalorder %s22, 1
      %p87 = scmp.ne.s32.totalorder %s82, %s84
      %p88 = scmp.eq.s32.totalorder %s22, 0
      %p89 = por %p87, %p88
      %p90 = scmp.ne.s32.totalorder %s82, %s84
      %p91 = scmp.eq.s32.totalorder %s27, 1
      %p92 = por %p90, %p91
      %p93 = scmp.ne.s32.totalorder %s84, %s85
      %p94 = scmp.eq.s32.totalorder %s27, 0
      %p95 = por %p93, %p94
      %p96 = scmp.ne.s32.totalorder %s84, %s85
      %p97 = scmp.eq.s32.totalorder %s28, 1
      %p98 = por %p96, %p97
      %p100 = scmp.ne.s32.totalorder %s85, %s99
      %p101 = scmp.eq.s32.totalorder %s28, 0
      %p102 = por %p100, %p101
      %s104 = sadd.s32 %s103, 1
      %p107 = scmp.eq.s32.totalorder %s22, 1
      %p108 = scmp.ne.s32.totalorder %s103, %s105
      %p109 = scmp.eq.s32.totalorder %s22, 0
      %p110 = por %p108, %p109
      %p111 = scmp.ne.s32.totalorder %s103, %s105
      %p112 = scmp.eq.s32.totalorder %s27, 1
      %p113 = por %p111, %p112
      %p114 = scmp.ne.s32.totalorder %s105, %s106
      %p115 = scmp.eq.s32.totalorder %s27, 0
      %p116 = por %p114, %p115
      %p117 = scmp.ne.s32.totalorder %s105, %s106
      %p118 = scmp.eq.s32.totalorder %s28, 1
      %p119 = por %p117, %p118
      %p121 = scmp.ne.s32.totalorder %s106, %s120
      %p122 = scmp.eq.s32.totalorder %s28, 0
      %p123 = por %p121, %p122
      %s125 = sadd.s32 %s124, 1
      %p128 = scmp.eq.s32.totalorder %s22, 1
      %p129 = scmp.ne.s32.totalorder %s124, %s126
      %p130 = scmp.eq.s32.totalorder %s22, 0
      %p131 = por %p129, %p130
      %p132 = scmp.ne.s32.totalorder %s124, %s126
      %p133 = scmp.eq.s32.totalorder %s27, 1
      %p134 = por %p132, %p133
      %p135 = scmp.ne.s32.totalorder %s126, %s127
      %p136 = scmp.eq.s32.totalorder %s27, 0
      %p137 = por %p135, %p136
      %p138 = scmp.ne.s32.totalorder %s126, %s127
      %p139 = scmp.eq.s32.totalorder %s28, 1
      %p140 = por %p138, %p139
      %p142 = scmp.ne.s32.totalorder %s127, %s141
      %p143 = scmp.eq.s32.totalorder %s28, 0
      %p144 = por %p142, %p143
      %s146 = sadd.s32 %s145, 1
      %p149 = scmp.eq.s32.totalorder %s22, 1
      %p150 = scmp.ne.s32.totalorder %s145, %s147
      %p151 = scmp.eq.s32.totalorder %s22, 0
      %p152 = por %p150, %p151
      %p153 = scmp.ne.s32.totalorder %s145, %s147
      %p154 = scmp.eq.s32.totalorder %s27, 1
      %p155 = por %p153, %p154
      %p156 = scmp.ne.s32.totalorder %s147, %s148
      %p157 = scmp.eq.s32.totalorder %s27, 0
      %p158 = por %p156, %p157
      %p159 = scmp.ne.s32.totalorder %s147, %s148
      %p160 = scmp.eq.s32.totalorder %s28, 1
      %p161 = por %p159, %p160
      %p163 = scmp.ne.s32.totalorder %s148, %s162
      %p164 = scmp.eq.s32.totalorder %s28, 0
      %p165 = por %p163, %p164
      %s166 = ssub.s32 %s22, %s29
      %p167 = scmp.eq.s32.totalorder %s166, 0
      %s169 = sadd.s32 %s168, 1
      %s170 = scalar_select %p167, %s168, %s169
      %p173 = pneg %p167
      %p174 = scmp.eq.s32.totalorder %s22, 1
      %p175 = por %p173, %p174
      %p176 = scmp.ne.s32.totalorder %s168, %s171
      %p177 = scmp.eq.s32.totalorder %s22, 0
      %p178 = por %p176, %p177
      %p179 = scmp.ne.s32.totalorder %s168, %s171
      %p180 = scmp.eq.s32.totalorder %s27, 1
      %p181 = por %p179, %p180
      %p182 = scmp.ne.s32.totalorder %s171, %s172
      %p183 = scmp.eq.s32.totalorder %s27, 0
      %p184 = por %p182, %p183
      %p185 = scmp.ne.s32.totalorder %s171, %s172
      %p186 = scmp.eq.s32.totalorder %s28, 1
      %p187 = por %p185, %p186
      %p189 = scmp.ne.s32.totalorder %s172, %s188
      %p190 = scmp.eq.s32.totalorder %s28, 0
      %p191 = por %p189, %p190
      %p192 = scmp.le.s32.totalorder 1, %s22
      %p193 = scmp.lt.s32.totalorder %s22, 3
      %p194 = pnand %p192, %p193
      %p195 = pneg %p194
      // Predicated region
      $region9: #{tpu_custom_call.1} parent=5 // pred_check
        _
      $region10: #{tpu_custom_call.1} parent=5 // pred_check_branch
        %197 = sbr.rel (%p194) target = $region12
      $region11: #{tpu_custom_call.1} parent=5 // pred_region
        %s198 = ssub.s32 %s22, 1
        // Predicated region
        $region13: #{tpu_custom_call.1} parent=11 // pred_check
          %p199 = pneg %p95
        $region14: #{tpu_custom_call.1} parent=11 // pred_check_branch
          %201 = sbr.rel (%p199) target = $region16
        $region15: #{tpu_custom_call.1} parent=11 // pred_region
          %s203 = ssub.s32 3072, 3072
          %204 = vsyncadd [#allocation6], %s203
          %s205 = sshll.u32 [#allocation7], 4
          %s206 = int_to_ptr.vmem [resolvable:$true] %s205
          %211 = dma.hbm_to_vmem [thread:$0]  %s2, 3072, %s206, [#allocation6], 192, 192, 12
        $region16: #{tpu_custom_call.1} parent=11 // pred_fallthru
          _
        // Predicated region
        $region17: #{tpu_custom_call.1} parent=11 // pred_check
          %p212 = pneg %p116
        $region18: #{tpu_custom_call.1} parent=11 // pred_check_branch
          %214 = sbr.rel (%p212) target = $region20
        $region19: #{tpu_custom_call.1} parent=11 // pred_region
          %s216 = ssub.s32 2048, 2048
          %217 = vsyncadd [#allocation9], %s216
          %s218 = sshll.u32 [#allocation8], 4
          %s219 = int_to_ptr.vmem [resolvable:$true] %s218
          %224 = dma.hbm_to_vmem [thread:$0]  %s3, 2048, %s219, [#allocation9], 128, 128, 8
        $region20: #{tpu_custom_call.1} parent=11 // pred_fallthru
          _
        // Predicated region
        $region21: #{tpu_custom_call.1} parent=11 // pred_check
          %p225 = pneg %p137
        $region22: #{tpu_custom_call.1} parent=11 // pred_check_branch
          %227 = sbr.rel (%p225) target = $region24
        $region23: #{tpu_custom_call.1} parent=11 // pred_region
          %s229 = ssub.s32 1024, 1024
          %230 = vsyncadd [#allocation9], %s229
          %s231 = sshll.u32 [#allocation10], 4
          %s232 = int_to_ptr.vmem [resolvable:$true] %s231
          %237 = dma.hbm_to_vmem [thread:$0]  %s4, 1024, %s232, [#allocation9], 64, 64, 4
        $region24: #{tpu_custom_call.1} parent=11 // pred_fallthru
          _
        // Predicated region
        $region25: #{tpu_custom_call.1} parent=11 // pred_check
          %p238 = pneg %p158
        $region26: #{tpu_custom_call.1} parent=11 // pred_check_branch
          %240 = sbr.rel (%p238) target = $region28
        $region27: #{tpu_custom_call.1} parent=11 // pred_region
          _
        $region28: #{tpu_custom_call.1} parent=11 // pred_fallthru
          _
      $region12: #{tpu_custom_call.1} parent=5 // pred_fallthru
        _
      %p241 = scmp.lt.s32.totalorder %s22, 2
      // Predicated region
      $region29: #{tpu_custom_call.1} parent=5 // pred_check
        %p242 = pneg %p241
      $region30: #{tpu_custom_call.1} parent=5 // pred_check_branch
        %244 = sbr.rel (%p242) target = $region32
      $region31: #{tpu_custom_call.1} parent=5 // pred_region
        // Predicated region
        $region33: #{tpu_custom_call.1} parent=31 // pred_check
          %p245 = pneg %p42
        $region34: #{tpu_custom_call.1} parent=31 // pred_check_branch
          %247 = sbr.rel (%p245) target = $region36
        $region35: #{tpu_custom_call.1} parent=31 // pred_region
          %s248 = sand.u32 %s32, 1
          %s249 = scalar_lea.sflag [#allocation3], %s248
          %s250 = sand.u32 %s32, 1
          %s251 = smul.addr %s250, 128
          %s252 = scalar_lea.vmem [#allocation2], %s251
          %s253 = smul.u32 32, %s22
          %s255 = ssub.s32 2048, 2048
          %256 = vsyncadd %s249, %s255
          %s257 = smul.addr %s253, 64
          %s258 = scalar_lea.hbm %s0, %s257
          %s259 = sshll.u32 %s252, 4
          %s260 = int_to_ptr.vmem [resolvable:$true] %s259
          %265 = dma.hbm_to_vmem [thread:$0]  %s258, 2048, %s260, %s249, 64, 64, 4
        $region36: #{tpu_custom_call.1} parent=31 // pred_fallthru
          _
        // Predicated region
        $region37: #{tpu_custom_call.1} parent=31 // pred_check
          %p266 = pneg %p68
        $region38: #{tpu_custom_call.1} parent=31 // pred_check_branch
          %268 = sbr.rel (%p266) target = $region40
        $region39: #{tpu_custom_call.1} parent=31 // pred_region
          %s269 = sand.u32 %s22, 1
          %s270 = scalar_lea.sflag [#allocation6], %s269
          %s271 = sand.u32 %s58, 1
          %s272 = smul.addr %s271, 256
          %s273 = scalar_lea.vmem [#allocation5], %s272
          %s274 = smul.u32 32, %s22
          %s276 = ssub.s32 4096, 4096
          %277 = vsyncadd %s270, %s276
          %s278 = smul.addr %s274, 128
          %s279 = scalar_lea.hbm %s1, %s278
          %s280 = sshll.u32 %s273, 4
          %s281 = int_to_ptr.vmem [resolvable:$true] %s280
          %286 = dma.hbm_to_vmem [thread:$0]  %s279, 4096, %s281, %s270, 128, 128, 8
        $region40: #{tpu_custom_call.1} parent=31 // pred_fallthru
          _
      $region32: #{tpu_custom_call.1} parent=5 // pred_fallthru
        _
      %p287 = scmp.le.s32.totalorder 1, %s22
      %p288 = scmp.lt.s32.totalorder %s22, 3
      %p289 = pnand %p287, %p288
      %p290 = pneg %p289
      // Predicated region
      $region41: #{tpu_custom_call.1} parent=5 // pred_check
        _
      $region42: #{tpu_custom_call.1} parent=5 // pred_check_branch
        %292 = sbr.rel (%p289) target = $region44
      $region43: #{tpu_custom_call.1} parent=5 // pred_region
        %s293 = ssub.s32 %s22, 1
        %s294 = sand.u32 %s35, 1
        %s295 = scalar_lea.sflag [#allocation3], %s294
        %s296 = sand.u32 %s35, 1
        %s297 = smul.addr %s296, 128
        %s298 = scalar_lea.vmem [#allocation2], %s297
        // Predicated region
        $region45: #{tpu_custom_call.1} parent=43 // pred_check
          %p299 = pneg %p48
        $region46: #{tpu_custom_call.1} parent=43 // pred_check_branch
          %301 = sbr.rel (%p299) target = $region48
        $region47: #{tpu_custom_call.1} parent=43 // pred_region
          %302 = dma.done %s295, 2048
        $region48: #{tpu_custom_call.1} parent=43 // pred_fallthru
          _
        %s303 = sand.u32 %s27, 1
        %s304 = scalar_lea.sflag [#allocation6], %s303
        %s305 = sand.u32 %s61, 1
        %s306 = smul.addr %s305, 256
        %s307 = scalar_lea.vmem [#allocation5], %s306
        // Predicated region
        $region49: #{tpu_custom_call.1} parent=43 // pred_check
          %p308 = pneg %p74
        $region50: #{tpu_custom_call.1} parent=43 // pred_check_branch
          %310 = sbr.rel (%p308) target = $region52
        $region51: #{tpu_custom_call.1} parent=43 // pred_region
          %311 = dma.done %s304, 4096
        $region52: #{tpu_custom_call.1} parent=43 // pred_fallthru
          _
        // Predicated region
        $region53: #{tpu_custom_call.1} parent=43 // pred_check
          %p312 = pneg %p95
        $region54: #{tpu_custom_call.1} parent=43 // pred_check_branch
          %314 = sbr.rel (%p312) target = $region56
        $region55: #{tpu_custom_call.1} parent=43 // pred_region
          %315 = dma.done [#allocation6], 3072
        $region56: #{tpu_custom_call.1} parent=43 // pred_fallthru
          _
        // Predicated region
        $region57: #{tpu_custom_call.1} parent=43 // pred_check
          %p316 = pneg %p116
        $region58: #{tpu_custom_call.1} parent=43 // pred_check_branch
          %318 = sbr.rel (%p316) target = $region60
        $region59: #{tpu_custom_call.1} parent=43 // pred_region
          %319 = dma.done [#allocation9], 2048
        $region60: #{tpu_custom_call.1} parent=43 // pred_fallthru
          _
        // Predicated region
        $region61: #{tpu_custom_call.1} parent=43 // pred_check
          %p320 = pneg %p137
        $region62: #{tpu_custom_call.1} parent=43 // pred_check_branch
          %322 = sbr.rel (%p320) target = $region64
        $region63: #{tpu_custom_call.1} parent=43 // pred_region
          %323 = dma.done [#allocation9], 1024
        $region64: #{tpu_custom_call.1} parent=43 // pred_fallthru
          _
        %s324 = sand.u32 %s35, 1
        %s325 = scalar_lea.sflag [#allocation3], %s324
        %s326 = sand.u32 %s35, 1
        %s327 = smul.addr %s326, 128
        %s328 = scalar_lea.vmem [#allocation2], %s327
        %p329 = pneg %p48
        %p330 = pneg %p45
        %s331 = sand.u32 %s27, 1
        %s332 = scalar_lea.sflag [#allocation6], %s331
        %s333 = sand.u32 %s61, 1
        %s334 = smul.addr %s333, 256
        %s335 = scalar_lea.vmem [#allocation5], %s334
        %p336 = pneg %p74
        %p337 = pneg %p71
        %p338 = pneg %p95
        %p339 = pneg %p92
        %p340 = pneg %p116
        %p341 = pneg %p113
        %p342 = pneg %p137
        %p343 = pneg %p134
        %p344 = pneg %p158
        %p345 = pneg %p155
        %p346 = pneg %p184
        %p347 = pneg %p181
        %s348 = sand.u32 %s171, 1
        %s349 = scalar_lea.sflag [#allocation4], %s348
        %s350 = sand.u32 %s171, 1
        %s351 = smul.addr %s350, 256
        %s352 = scalar_lea.vmem [#allocation11], %s351
        %s353 = smul.u32 32, %s27
        %s354 = smul.u32 32, %s27
        %s355 = smul.u32 32, %s27
        %v357 = vld [vmem:[%s298] sm:$0xf]
        %v358 = vld [vmem:[%s298 + $0x4] sm:$0xf]
        %v359 = vld [vmem:[%s298 + $0x8] sm:$0xf]
        %v360 = vld [vmem:[%s298 + $0xc] sm:$0xf]
        %v361 = vld [vmem:[%s298 + $0x10] sm:$0xf]
        %v362 = vld [vmem:[%s298 + $0x14] sm:$0xf]
        %v363 = vld [vmem:[%s298 + $0x18] sm:$0xf]
        %v364 = vld [vmem:[%s298 + $0x1c] sm:$0xf]
        %v365 = vld [vmem:[%s298 + $0x20] sm:$0xf]
        %v366 = vld [vmem:[%s298 + $0x24] sm:$0xf]
        %v367 = vld [vmem:[%s298 + $0x28] sm:$0xf]
        %v368 = vld [vmem:[%s298 + $0x2c] sm:$0xf]
        %v369 = vld [vmem:[%s298 + $0x30] sm:$0xf]
        %v370 = vld [vmem:[%s298 + $0x34] sm:$0xf]
        %v371 = vld [vmem:[%s298 + $0x38] sm:$0xf]
        %v372 = vld [vmem:[%s298 + $0x3c] sm:$0xf]
        %v373 = vld [vmem:[%s298 + $0x40] sm:$0xf]
        %v374 = vld [vmem:[%s298 + $0x44] sm:$0xf]
        %v375 = vld [vmem:[%s298 + $0x48] sm:$0xf]
        %v376 = vld [vmem:[%s298 + $0x4c] sm:$0xf]
        %v377 = vld [vmem:[%s298 + $0x50] sm:$0xf]
        %v378 = vld [vmem:[%s298 + $0x54] sm:$0xf]
        %v379 = vld [vmem:[%s298 + $0x58] sm:$0xf]
        %v380 = vld [vmem:[%s298 + $0x5c] sm:$0xf]
        %v381 = vld [vmem:[%s298 + $0x60] sm:$0xf]
        %v382 = vld [vmem:[%s298 + $0x64] sm:$0xf]
        %v383 = vld [vmem:[%s298 + $0x68] sm:$0xf]
        %v384 = vld [vmem:[%s298 + $0x6c] sm:$0xf]
        %v385 = vld [vmem:[%s298 + $0x70] sm:$0xf]
        %v386 = vld [vmem:[%s298 + $0x74] sm:$0xf]
        %v387 = vld [vmem:[%s298 + $0x78] sm:$0xf]
        %v388 = vld [vmem:[%s298 + $0x7c] sm:$0xf]
        %v389 = vld [vmem:[%s307] sm:$0xff]
        %v390 = vld [vmem:[%s307 + $0x8] sm:$0xff]
        %v391 = vld [vmem:[%s307 + $0x10] sm:$0xff]
        %v392 = vld [vmem:[%s307 + $0x18] sm:$0xff]
        %v393 = vld [vmem:[%s307 + $0x20] sm:$0xff]
        %v394 = vld [vmem:[%s307 + $0x28] sm:$0xff]
        %v395 = vld [vmem:[%s307 + $0x30] sm:$0xff]
        %v396 = vld [vmem:[%s307 + $0x38] sm:$0xff]
        %v397 = vld [vmem:[%s307 + $0x40] sm:$0xff]
        %v398 = vld [vmem:[%s307 + $0x48] sm:$0xff]
        %v399 = vld [vmem:[%s307 + $0x50] sm:$0xff]
        %v400 = vld [vmem:[%s307 + $0x58] sm:$0xff]
        %v401 = vld [vmem:[%s307 + $0x60] sm:$0xff]
        %v402 = vld [vmem:[%s307 + $0x68] sm:$0xff]
        %v403 = vld [vmem:[%s307 + $0x70] sm:$0xff]
        %v404 = vld [vmem:[%s307 + $0x78] sm:$0xff]
        %v405 = vld [vmem:[%s307 + $0x80] sm:$0xff]
        %v406 = vld [vmem:[%s307 + $0x88] sm:$0xff]
        %v407 = vld [vmem:[%s307 + $0x90] sm:$0xff]
        %v408 = vld [vmem:[%s307 + $0x98] sm:$0xff]
        %v409 = vld [vmem:[%s307 + $0xa0] sm:$0xff]
        %v410 = vld [vmem:[%s307 + $0xa8] sm:$0xff]
        %v411 = vld [vmem:[%s307 + $0xb0] sm:$0xff]
        %v412 = vld [vmem:[%s307 + $0xb8] sm:$0xff]
        %v413 = vld [vmem:[%s307 + $0xc0] sm:$0xff]
        %v414 = vld [vmem:[%s307 + $0xc8] sm:$0xff]
        %v415 = vld [vmem:[%s307 + $0xd0] sm:$0xff]
        %v416 = vld [vmem:[%s307 + $0xd8] sm:$0xff]
        %v417 = vld [vmem:[%s307 + $0xe0] sm:$0xff]
        %v418 = vld [vmem:[%s307 + $0xe8] sm:$0xff]
        %v419 = vld [vmem:[%s307 + $0xf0] sm:$0xff]
        %v420 = vld [vmem:[%s307 + $0xf8] sm:$0xff]
        %v421 = vpack.c.bf16 %v390, %v389
        %v422 = vpack.c.bf16 %v392, %v391
        %v423 = vpack.c.bf16 %v394, %v393
        %v424 = vpack.c.bf16 %v396, %v395
        %v425 = vpack.c.bf16 %v398, %v397
        %v426 = vpack.c.bf16 %v400, %v399
        %v427 = vpack.c.bf16 %v402, %v401
        %v428 = vpack.c.bf16 %v404, %v403
        %v429 = vpack.c.bf16 %v406, %v405
        %v430 = vpack.c.bf16 %v408, %v407
        %v431 = vpack.c.bf16 %v410, %v409
        %v432 = vpack.c.bf16 %v412, %v411
        %v433 = vpack.c.bf16 %v414, %v413
        %v434 = vpack.c.bf16 %v416, %v415
        %v435 = vpack.c.bf16 %v418, %v417
        %v436 = vpack.c.bf16 %v420, %v419
        %v437 = vld [vmem:[#allocation7] sm:$0xff]
        %v438 = vld [vmem:[#allocation7 + $0x8] sm:$0xf]
        %v439 = vld [vmem:[#allocation7 + $0xc] sm:$0xff]
        %v440 = vld [vmem:[#allocation7 + $0x14] sm:$0xf]
        %v441 = vld [vmem:[#allocation7 + $0x18] sm:$0xff]
        %v442 = vld [vmem:[#allocation7 + $0x20] sm:$0xf]
        %v443 = vld [vmem:[#allocation7 + $0x24] sm:$0xff]
        %v444 = vld [vmem:[#allocation7 + $0x2c] sm:$0xf]
        %v445 = vld [vmem:[#allocation7 + $0x30] sm:$0xff]
        %v446 = vld [vmem:[#allocation7 + $0x38] sm:$0xf]
        %v447 = vld [vmem:[#allocation7 + $0x3c] sm:$0xff]
        %v448 = vld [vmem:[#allocation7 + $0x44] sm:$0xf]
        %v449 = vld [vmem:[#allocation7 + $0x48] sm:$0xff]
        %v450 = vld [vmem:[#allocation7 + $0x50] sm:$0xf]
        %v451 = vld [vmem:[#allocation7 + $0x54] sm:$0xff]
        %v452 = vld [vmem:[#allocation7 + $0x5c] sm:$0xf]
        %v453 = vld [vmem:[#allocation7 + $0x60] sm:$0xff]
        %v454 = vld [vmem:[#allocation7 + $0x68] sm:$0xf]
        %v455 = vld [vmem:[#allocation7 + $0x6c] sm:$0xff]
        %v456 = vld [vmem:[#allocation7 + $0x74] sm:$0xf]
        %v457 = vld [vmem:[#allocation7 + $0x78] sm:$0xff]
        %v458 = vld [vmem:[#allocation7 + $0x80] sm:$0xf]
        %v459 = vld [vmem:[#allocation7 + $0x84] sm:$0xff]
        %v460 = vld [vmem:[#allocation7 + $0x8c] sm:$0xf]
        %v461 = vld [vmem:[#allocation7 + $0x90] sm:$0xff]
        %v462 = vld [vmem:[#allocation7 + $0x98] sm:$0xf]
        %v463 = vld [vmem:[#allocation7 + $0x9c] sm:$0xff]
        %v464 = vld [vmem:[#allocation7 + $0xa4] sm:$0xf]
        %v465 = vld [vmem:[#allocation7 + $0xa8] sm:$0xff]
        %v466 = vld [vmem:[#allocation7 + $0xb0] sm:$0xf]
        %v467 = vld [vmem:[#allocation7 + $0xb4] sm:$0xff]
        %v468 = vld [vmem:[#allocation7 + $0xbc] sm:$0xf]
        %v469 = vld [vmem:[%s5] sm:$0x7]
        %v471 = vlaneseq
        %v472 = vshrl.u32 %v471, 7
        %v473 = vsub.s32 0, %v472
        %v474 = vrot.slane %v469, %v473
        %v475 = vlaneseq
        %v476 = vshrl.u32 %v475, 7
        %v477 = vsub.s32 1, %v476
        %v478 = vrot.slane %v469, %v477
        %v479 = vlaneseq
        %v480 = vshrl.u32 %v479, 7
        %v481 = vsub.s32 2, %v480
        %v482 = vrot.slane %v469, %v481
        %v518 = vunpack.c.l.b16 %v357
        %v519 = vunpack.c.l.b16 %v358
        %v520 = vunpack.c.l.b16 %v359
        %v521 = vunpack.c.l.b16 %v360
        %v522 = vunpack.c.l.b16 %v361
        %v523 = vunpack.c.l.b16 %v362
        %v524 = vunpack.c.l.b16 %v363
        %v525 = vunpack.c.l.b16 %v364
        %v526 = vunpack.c.l.b16 %v365
        %v527 = vunpack.c.l.b16 %v366
        %v528 = vunpack.c.l.b16 %v367
        %v529 = vunpack.c.l.b16 %v368
        %v530 = vunpack.c.l.b16 %v369
        %v531 = vunpack.c.l.b16 %v370
        %v532 = vunpack.c.l.b16 %v371
        %v533 = vunpack.c.l.b16 %v372
        %v534 = vunpack.c.l.b16 %v373
        %v535 = vunpack.c.l.b16 %v374
        %v536 = vunpack.c.l.b16 %v375
        %v537 = vunpack.c.l.b16 %v376
        %v538 = vunpack.c.l.b16 %v377
        %v539 = vunpack.c.l.b16 %v378
        %v540 = vunpack.c.l.b16 %v379
        %v541 = vunpack.c.l.b16 %v380
        %v542 = vunpack.c.l.b16 %v381
        %v543 = vunpack.c.l.b16 %v382
        %v544 = vunpack.c.l.b16 %v383
        %v545 = vunpack.c.l.b16 %v384
        %v546 = vunpack.c.l.b16 %v385
        %v547 = vunpack.c.l.b16 %v386
        %v548 = vunpack.c.l.b16 %v387
        %v549 = vunpack.c.l.b16 %v388
        %v550 = vpack.c.b16 %v519, %v518
        %v551 = vpack.c.b16 %v521, %v520
        %v552 = vpack.c.b16 %v523, %v522
        %v553 = vpack.c.b16 %v525, %v524
        %v554 = vpack.c.b16 %v527, %v526
        %v555 = vpack.c.b16 %v529, %v528
        %v556 = vpack.c.b16 %v531, %v530
        %v557 = vpack.c.b16 %v533, %v532
        %v558 = vpack.c.b16 %v535, %v534
        %v559 = vpack.c.b16 %v537, %v536
        %v560 = vpack.c.b16 %v539, %v538
        %v561 = vpack.c.b16 %v541, %v540
        %v562 = vpack.c.b16 %v543, %v542
        %v563 = vpack.c.b16 %v545, %v544
        %v564 = vpack.c.b16 %v547, %v546
        %v565 = vpack.c.b16 %v549, %v548
        %v614 = vunpack.c.l.b16 %v437
        %v615 = vunpack.c.h.b16 %v437
        %v616 = vunpack.c.l.b16 %v438
        %v617 = vunpack.c.l.b16 %v439
        %v618 = vunpack.c.h.b16 %v439
        %v619 = vunpack.c.l.b16 %v440
        %v620 = vunpack.c.l.b16 %v441
        %v621 = vunpack.c.h.b16 %v441
        %v622 = vunpack.c.l.b16 %v442
        %v623 = vunpack.c.l.b16 %v443
        %v624 = vunpack.c.h.b16 %v443
        %v625 = vunpack.c.l.b16 %v444
        %v626 = vunpack.c.l.b16 %v445
        %v627 = vunpack.c.h.b16 %v445
        %v628 = vunpack.c.l.b16 %v446
        %v629 = vunpack.c.l.b16 %v447
        %v630 = vunpack.c.h.b16 %v447
        %v631 = vunpack.c.l.b16 %v448
        %v632 = vunpack.c.l.b16 %v449
        %v633 = vunpack.c.h.b16 %v449
        %v634 = vunpack.c.l.b16 %v450
        %v635 = vunpack.c.l.b16 %v451
        %v636 = vunpack.c.h.b16 %v451
        %v637 = vunpack.c.l.b16 %v452
        %v638 = vunpack.c.l.b16 %v453
        %v639 = vunpack.c.h.b16 %v453
        %v640 = vunpack.c.l.b16 %v454
        %v641 = vunpack.c.l.b16 %v455
        %v642 = vunpack.c.h.b16 %v455
        %v643 = vunpack.c.l.b16 %v456
        %v644 = vunpack.c.l.b16 %v457
        %v645 = vunpack.c.h.b16 %v457
        %v646 = vunpack.c.l.b16 %v458
        %v647 = vunpack.c.l.b16 %v459
        %v648 = vunpack.c.h.b16 %v459
        %v649 = vunpack.c.l.b16 %v460
        %v650 = vunpack.c.l.b16 %v461
        %v651 = vunpack.c.h.b16 %v461
        %v652 = vunpack.c.l.b16 %v462
        %v653 = vunpack.c.l.b16 %v463
        %v654 = vunpack.c.h.b16 %v463
        %v655 = vunpack.c.l.b16 %v464
        %v656 = vunpack.c.l.b16 %v465
        %v657 = vunpack.c.h.b16 %v465
        %v658 = vunpack.c.l.b16 %v466
        %v659 = vunpack.c.l.b16 %v467
        %v660 = vunpack.c.h.b16 %v467
        %v661 = vunpack.c.l.b16 %v468
        %v662 = vpack.c.b16 %v617, %v614
        %v663 = vpack.c.b16 %v618, %v615
        %v664 = vpack.c.b16 %v619, %v616
        %v665 = vpack.c.b16 %v623, %v620
        %v666 = vpack.c.b16 %v624, %v621
        %v667 = vpack.c.b16 %v625, %v622
        %v668 = vpack.c.b16 %v629, %v626
        %v669 = vpack.c.b16 %v630, %v627
        %v670 = vpack.c.b16 %v631, %v628
        %v671 = vpack.c.b16 %v635, %v632
        %v672 = vpack.c.b16 %v636, %v633
        %v673 = vpack.c.b16 %v637, %v634
        %v674 = vpack.c.b16 %v641, %v638
        %v675 = vpack.c.b16 %v642, %v639
        %v676 = vpack.c.b16 %v643, %v640
        %v677 = vpack.c.b16 %v647, %v644
        %v678 = vpack.c.b16 %v648, %v645
        %v679 = vpack.c.b16 %v649, %v646
        %v680 = vpack.c.b16 %v653, %v650
        %v681 = vpack.c.b16 %v654, %v651
        %v682 = vpack.c.b16 %v655, %v652
        %v683 = vpack.c.b16 %v659, %v656
        %v684 = vpack.c.b16 %v660, %v657
        %v685 = vpack.c.b16 %v661, %v658
        %710 = vmatprep.subr.bf16.mxu0 %v684
        %711 = vmatpush1.bf16.msra.mxu0 %v683
        %712 = vmatprep.subr.bf16.mxu0 %v681
        %713 = vmatpush1.bf16.msra.mxu0 %v680
        %714 = vmatprep.subr.bf16.mxu0 %v678
        %715 = vmatpush1.bf16.msra.mxu0 %v677
        %716 = vmatprep.subr.bf16.mxu0 %v675
        %717 = vmatpush1.bf16.msra.mxu0 %v674
        %718 = vmatprep.subr.bf16.mxu0 %v672
        %719 = vmatpush1.bf16.msra.mxu0 %v671
        %720 = vmatprep.subr.bf16.mxu0 %v669
        %721 = vmatpush1.bf16.msra.mxu0 %v668
        %722 = vmatprep.subr.bf16.mxu0 %v666
        %723 = vmatpush1.bf16.msra.mxu0 %v665
        %724 = vmatprep.subr.bf16.mxu0 %v663
        %725 = vmatpush1.bf16.msra.mxu0 %v662
        %726 = vmatprep.subr.bf16.mxu0 0
        %727 = vmatpush2.bf16.msra.mxu0 0
        %728 = vmatprep.subr.bf16.mxu0 0
        %729 = vmatpush2.bf16.msra.mxu0 0
        %730 = vmatprep.subr.bf16.mxu0 0
        %731 = vmatpush2.bf16.msra.mxu0 0
        %732 = vmatprep.subr.bf16.mxu0 0
        %733 = vmatpush2.bf16.msra.mxu0 0
        %734 = vmatprep.subr.bf16.mxu0 0
        %735 = vmatpush2.bf16.msra.mxu0 0
        %736 = vmatprep.subr.bf16.mxu0 0
        %737 = vmatpush2.bf16.msra.mxu0 0
        %738 = vmatprep.subr.bf16.mxu0 0
        %739 = vmatpush2.bf16.msra.mxu0 0
        %740 = vmatprep.subr.bf16.mxu0 0
        %741 = vmatpush2.bf16.msra.mxu0 0
        %742 = vmatprep.mubr.bf16.mxu0 0
        %743 = vmatmul.mubr.bf16.gmra.mxu0 %v550
        %v744 = vpop.f32.mrf.mxu0
        %v745 = vadd.f32 %v474, %v744
        %v746 = vpop.f32.mrf.mxu0
        %v747 = vadd.f32 %v478, %v746
        %v748 = vpop.f32.mrf.mxu0
        %v749 = vadd.f32 %v474, %v748
        %v750 = vpop.f32.mrf.mxu0
        %v751 = vadd.f32 %v478, %v750
        %752 = vmatprep.mubr.bf16.mxu0 0
        %753 = vmatmul.mubr.bf16.gmra.mxu0 %v551
        %v754 = vpop.f32.mrf.mxu0
        %v755 = vadd.f32 %v474, %v754
        %v756 = vpop.f32.mrf.mxu0
        %v757 = vadd.f32 %v478, %v756
        %v758 = vpop.f32.mrf.mxu0
        %v759 = vadd.f32 %v474, %v758
        %v760 = vpop.f32.mrf.mxu0
        %v761 = vadd.f32 %v478, %v760
        %762 = vmatprep.mubr.bf16.mxu0 0
        %763 = vmatmul.mubr.bf16.gmra.mxu0 %v552
        %v764 = vpop.f32.mrf.mxu0
        %v765 = vadd.f32 %v474, %v764
        %v766 = vpop.f32.mrf.mxu0
        %v767 = vadd.f32 %v478, %v766
        %v768 = vpop.f32.mrf.mxu0
        %v769 = vadd.f32 %v474, %v768
        %v770 = vpop.f32.mrf.mxu0
        %v771 = vadd.f32 %v478, %v770
        %772 = vmatprep.mubr.bf16.mxu0 0
        %773 = vmatmul.mubr.bf16.gmra.mxu0 %v553
        %v774 = vpop.f32.mrf.mxu0
        %v775 = vadd.f32 %v474, %v774
        %v776 = vpop.f32.mrf.mxu0
        %v777 = vadd.f32 %v478, %v776
        %v778 = vpop.f32.mrf.mxu0
        %v779 = vadd.f32 %v474, %v778
        %v780 = vpop.f32.mrf.mxu0
        %v781 = vadd.f32 %v478, %v780
        %782 = vmatprep.mubr.bf16.mxu0 0
        %783 = vmatmul.mubr.bf16.gmra.mxu0 %v554
        %v784 = vpop.f32.mrf.mxu0
        %v785 = vadd.f32 %v474, %v784
        %v786 = vpop.f32.mrf.mxu0
        %v787 = vadd.f32 %v478, %v786
        %v788 = vpop.f32.mrf.mxu0
        %v789 = vadd.f32 %v474, %v788
        %v790 = vpop.f32.mrf.mxu0
        %v791 = vadd.f32 %v478, %v790
        %792 = vmatprep.mubr.bf16.mxu0 0
        %793 = vmatmul.mubr.bf16.gmra.mxu0 %v555
        %v794 = vpop.f32.mrf.mxu0
        %v795 = vadd.f32 %v474, %v794
        %v796 = vpop.f32.mrf.mxu0
        %v797 = vadd.f32 %v478, %v796
        %v798 = vpop.f32.mrf.mxu0
        %v799 = vadd.f32 %v474, %v798
        %v800 = vpop.f32.mrf.mxu0
        %v801 = vadd.f32 %v478, %v800
        %802 = vmatprep.mubr.bf16.mxu0 0
        %803 = vmatmul.mubr.bf16.gmra.mxu0 %v556
        %v804 = vpop.f32.mrf.mxu0
        %v805 = vadd.f32 %v474, %v804
        %v806 = vpop.f32.mrf.mxu0
        %v807 = vadd.f32 %v478, %v806
        %v808 = vpop.f32.mrf.mxu0
        %v809 = vadd.f32 %v474, %v808
        %v810 = vpop.f32.mrf.mxu0
        %v811 = vadd.f32 %v478, %v810
        %812 = vmatprep.mubr.bf16.mxu0 0
        %813 = vmatmul.mubr.bf16.gmra.mxu0 %v557
        %v814 = vpop.f32.mrf.mxu0
        %v815 = vadd.f32 %v474, %v814
        %v816 = vpop.f32.mrf.mxu0
        %v817 = vadd.f32 %v478, %v816
        %v818 = vpop.f32.mrf.mxu0
        %v819 = vadd.f32 %v474, %v818
        %v820 = vpop.f32.mrf.mxu0
        %v821 = vadd.f32 %v478, %v820
        %822 = vmatprep.mubr.bf16.mxu0 0
        %823 = vmatmul.mubr.bf16.gmra.mxu0 %v558
        %v824 = vpop.f32.mrf.mxu0
        %v825 = vadd.f32 %v474, %v824
        %v826 = vpop.f32.mrf.mxu0
        %v827 = vadd.f32 %v478, %v826
        %v828 = vpop.f32.mrf.mxu0
        %v829 = vadd.f32 %v474, %v828
        %v830 = vpop.f32.mrf.mxu0
        %v831 = vadd.f32 %v478, %v830
        %832 = vmatprep.mubr.bf16.mxu0 0
        %833 = vmatmul.mubr.bf16.gmra.mxu0 %v559
        %v834 = vpop.f32.mrf.mxu0
        %v835 = vadd.f32 %v474, %v834
        %v836 = vpop.f32.mrf.mxu0
        %v837 = vadd.f32 %v478, %v836
        %v838 = vpop.f32.mrf.mxu0
        %v839 = vadd.f32 %v474, %v838
        %v840 = vpop.f32.mrf.mxu0
        %v841 = vadd.f32 %v478, %v840
        %842 = vmatprep.mubr.bf16.mxu0 0
        %843 = vmatmul.mubr.bf16.gmra.mxu0 %v560
        %v844 = vpop.f32.mrf.mxu0
        %v845 = vadd.f32 %v474, %v844
        %v846 = vpop.f32.mrf.mxu0
        %v847 = vadd.f32 %v478, %v846
        %v848 = vpop.f32.mrf.mxu0
        %v849 = vadd.f32 %v474, %v848
        %v850 = vpop.f32.mrf.mxu0
        %v851 = vadd.f32 %v478, %v850
        %852 = vmatprep.mubr.bf16.mxu0 0
        %853 = vmatmul.mubr.bf16.gmra.mxu0 %v561
        %v854 = vpop.f32.mrf.mxu0
        %v855 = vadd.f32 %v474, %v854
        %v856 = vpop.f32.mrf.mxu0
        %v857 = vadd.f32 %v478, %v856
        %v858 = vpop.f32.mrf.mxu0
        %v859 = vadd.f32 %v474, %v858
        %v860 = vpop.f32.mrf.mxu0
        %v861 = vadd.f32 %v478, %v860
        %862 = vmatprep.mubr.bf16.mxu0 0
        %863 = vmatmul.mubr.bf16.gmra.mxu0 %v562
        %v864 = vpop.f32.mrf.mxu0
        %v865 = vadd.f32 %v474, %v864
        %v866 = vpop.f32.mrf.mxu0
        %v867 = vadd.f32 %v478, %v866
        %v868 = vpop.f32.mrf.mxu0
        %v869 = vadd.f32 %v474, %v868
        %v870 = vpop.f32.mrf.mxu0
        %v871 = vadd.f32 %v478, %v870
        %872 = vmatprep.mubr.bf16.mxu0 0
        %873 = vmatmul.mubr.bf16.gmra.mxu0 %v563
        %v874 = vpop.f32.mrf.mxu0
        %v875 = vadd.f32 %v474, %v874
        %v876 = vpop.f32.mrf.mxu0
        %v877 = vadd.f32 %v478, %v876
        %v878 = vpop.f32.mrf.mxu0
        %v879 = vadd.f32 %v474, %v878
        %v880 = vpop.f32.mrf.mxu0
        %v881 = vadd.f32 %v478, %v880
        %882 = vmatprep.mubr.bf16.mxu0 0
        %883 = vmatmul.mubr.bf16.gmra.mxu0 %v564
        %v884 = vpop.f32.mrf.mxu0
        %v885 = vadd.f32 %v474, %v884
        %v886 = vpop.f32.mrf.mxu0
        %v887 = vadd.f32 %v478, %v886
        %v888 = vpop.f32.mrf.mxu0
        %v889 = vadd.f32 %v474, %v888
        %v890 = vpop.f32.mrf.mxu0
        %v891 = vadd.f32 %v478, %v890
        %892 = vmatprep.mubr.bf16.mxu0 0
        %893 = vmatmul.mubr.bf16.gmra.mxu0 %v565
        %v894 = vpop.f32.mrf.mxu0
        %v895 = vadd.f32 %v474, %v894
        %v896 = vpop.f32.mrf.mxu0
        %v897 = vadd.f32 %v478, %v896
        %v898 = vpop.f32.mrf.mxu0
        %v899 = vadd.f32 %v474, %v898
        %v900 = vpop.f32.mrf.mxu0
        %v901 = vadd.f32 %v478, %v900
        %902 = vdwg.mxu0
        %903 = vmatprep.subr.bf16.mxu0 0
        %904 = vmatpush1.bf16.msra.mxu0 %v685
        %905 = vmatprep.subr.bf16.mxu0 0
        %906 = vmatpush1.bf16.msra.mxu0 %v682
        %907 = vmatprep.subr.bf16.mxu0 0
        %908 = vmatpush1.bf16.msra.mxu0 %v679
        %909 = vmatprep.subr.bf16.mxu0 0
        %910 = vmatpush1.bf16.msra.mxu0 %v676
        %911 = vmatprep.subr.bf16.mxu0 0
        %912 = vmatpush1.bf16.msra.mxu0 %v673
        %913 = vmatprep.subr.bf16.mxu0 0
        %914 = vmatpush1.bf16.msra.mxu0 %v670
        %915 = vmatprep.subr.bf16.mxu0 0
        %916 = vmatpush1.bf16.msra.mxu0 %v667
        %917 = vmatprep.subr.bf16.mxu0 0
        %918 = vmatpush1.bf16.msra.mxu0 %v664
        %919 = vmatprep.subr.bf16.mxu0 0
        %920 = vmatpush2.bf16.msra.mxu0 0
        %921 = vmatprep.subr.bf16.mxu0 0
        %922 = vmatpush2.bf16.msra.mxu0 0
        %923 = vmatprep.subr.bf16.mxu0 0
        %924 = vmatpush2.bf16.msra.mxu0 0
        %925 = vmatprep.subr.bf16.mxu0 0
        %926 = vmatpush2.bf16.msra.mxu0 0
        %927 = vmatprep.subr.bf16.mxu0 0
        %928 = vmatpush2.bf16.msra.mxu0 0
        %929 = vmatprep.subr.bf16.mxu0 0
        %930 = vmatpush2.bf16.msra.mxu0 0
        %931 = vmatprep.subr.bf16.mxu0 0
        %932 = vmatpush2.bf16.msra.mxu0 0
        %933 = vmatprep.subr.bf16.mxu0 0
        %934 = vmatpush2.bf16.msra.mxu0 0
        %935 = vmatprep.mubr.bf16.mxu0 0
        %936 = vmatmul.mubr.bf16.gmra.mxu0 %v550
        %v937 = vpop.f32.mrf.mxu0
        %v938 = vadd.f32 %v482, %v937
        %v939 = vpop.f32.mrf.mxu0
        %v940 = vpop.f32.mrf.mxu0
        %v941 = vadd.f32 %v482, %v940
        %v942 = vpop.f32.mrf.mxu0
        %943 = vmatprep.mubr.bf16.mxu0 0
        %944 = vmatmul.mubr.bf16.gmra.mxu0 %v551
        %v945 = vpop.f32.mrf.mxu0
        %v946 = vadd.f32 %v482, %v945
        %v947 = vpop.f32.mrf.mxu0
        %v948 = vpop.f32.mrf.mxu0
        %v949 = vadd.f32 %v482, %v948
        %v950 = vpop.f32.mrf.mxu0
        %951 = vmatprep.mubr.bf16.mxu0 0
        %952 = vmatmul.mubr.bf16.gmra.mxu0 %v552
        %v953 = vpop.f32.mrf.mxu0
        %v954 = vadd.f32 %v482, %v953
        %v955 = vpop.f32.mrf.mxu0
        %v956 = vpop.f32.mrf.mxu0
        %v957 = vadd.f32 %v482, %v956
        %v958 = vpop.f32.mrf.mxu0
        %959 = vmatprep.mubr.bf16.mxu0 0
        %960 = vmatmul.mubr.bf16.gmra.mxu0 %v553
        %v961 = vpop.f32.mrf.mxu0
        %v962 = vadd.f32 %v482, %v961
        %v963 = vpop.f32.mrf.mxu0
        %v964 = vpop.f32.mrf.mxu0
        %v965 = vadd.f32 %v482, %v964
        %v966 = vpop.f32.mrf.mxu0
        %967 = vmatprep.mubr.bf16.mxu0 0
        %968 = vmatmul.mubr.bf16.gmra.mxu0 %v554
        %v969 = vpop.f32.mrf.mxu0
        %v970 = vadd.f32 %v482, %v969
        %v971 = vpop.f32.mrf.mxu0
        %v972 = vpop.f32.mrf.mxu0
        %v973 = vadd.f32 %v482, %v972
        %v974 = vpop.f32.mrf.mxu0
        %975 = vmatprep.mubr.bf16.mxu0 0
        %976 = vmatmul.mubr.bf16.gmra.mxu0 %v555
        %v977 = vpop.f32.mrf.mxu0
        %v978 = vadd.f32 %v482, %v977
        %v979 = vpop.f32.mrf.mxu0
        %v980 = vpop.f32.mrf.mxu0
        %v981 = vadd.f32 %v482, %v980
        %v982 = vpop.f32.mrf.mxu0
        %983 = vmatprep.mubr.bf16.mxu0 0
        %984 = vmatmul.mubr.bf16.gmra.mxu0 %v556
        %v985 = vpop.f32.mrf.mxu0
        %v986 = vadd.f32 %v482, %v985
        %v987 = vpop.f32.mrf.mxu0
        %v988 = vpop.f32.mrf.mxu0
        %v989 = vadd.f32 %v482, %v988
        %v990 = vpop.f32.mrf.mxu0
        %991 = vmatprep.mubr.bf16.mxu0 0
        %992 = vmatmul.mubr.bf16.gmra.mxu0 %v557
        %v993 = vpop.f32.mrf.mxu0
        %v994 = vadd.f32 %v482, %v993
        %v995 = vpop.f32.mrf.mxu0
        %v996 = vpop.f32.mrf.mxu0
        %v997 = vadd.f32 %v482, %v996
        %v998 = vpop.f32.mrf.mxu0
        %999 = vmatprep.mubr.bf16.mxu0 0
        %1000 = vmatmul.mubr.bf16.gmra.mxu0 %v558
        %v1001 = vpop.f32.mrf.mxu0
        %v1002 = vadd.f32 %v482, %v1001
        %v1003 = vpop.f32.mrf.mxu0
        %v1004 = vpop.f32.mrf.mxu0
        %v1005 = vadd.f32 %v482, %v1004
        %v1006 = vpop.f32.mrf.mxu0
        %1007 = vmatprep.mubr.bf16.mxu0 0
        %1008 = vmatmul.mubr.bf16.gmra.mxu0 %v559
        %v1009 = vpop.f32.mrf.mxu0
        %v1010 = vadd.f32 %v482, %v1009
        %v1011 = vpop.f32.mrf.mxu0
        %v1012 = vpop.f32.mrf.mxu0
        %v1013 = vadd.f32 %v482, %v1012
        %v1014 = vpop.f32.mrf.mxu0
        %1015 = vmatprep.mubr.bf16.mxu0 0
        %1016 = vmatmul.mubr.bf16.gmra.mxu0 %v560
        %v1017 = vpop.f32.mrf.mxu0
        %v1018 = vadd.f32 %v482, %v1017
        %v1019 = vpop.f32.mrf.mxu0
        %v1020 = vpop.f32.mrf.mxu0
        %v1021 = vadd.f32 %v482, %v1020
        %v1022 = vpop.f32.mrf.mxu0
        %1023 = vmatprep.mubr.bf16.mxu0 0
        %1024 = vmatmul.mubr.bf16.gmra.mxu0 %v561
        %v1025 = vpop.f32.mrf.mxu0
        %v1026 = vadd.f32 %v482, %v1025
        %v1027 = vpop.f32.mrf.mxu0
        %v1028 = vpop.f32.mrf.mxu0
        %v1029 = vadd.f32 %v482, %v1028
        %v1030 = vpop.f32.mrf.mxu0
        %1031 = vmatprep.mubr.bf16.mxu0 0
        %1032 = vmatmul.mubr.bf16.gmra.mxu0 %v562
        %v1033 = vpop.f32.mrf.mxu0
        %v1034 = vadd.f32 %v482, %v1033
        %v1035 = vpop.f32.mrf.mxu0
        %v1036 = vpop.f32.mrf.mxu0
        %v1037 = vadd.f32 %v482, %v1036
        %v1038 = vpop.f32.mrf.mxu0
        %1039 = vmatprep.mubr.bf16.mxu0 0
        %1040 = vmatmul.mubr.bf16.gmra.mxu0 %v563
        %v1041 = vpop.f32.mrf.mxu0
        %v1042 = vadd.f32 %v482, %v1041
        %v1043 = vpop.f32.mrf.mxu0
        %v1044 = vpop.f32.mrf.mxu0
        %v1045 = vadd.f32 %v482, %v1044
        %v1046 = vpop.f32.mrf.mxu0
        %1047 = vmatprep.mubr.bf16.mxu0 0
        %1048 = vmatmul.mubr.bf16.gmra.mxu0 %v564
        %v1049 = vpop.f32.mrf.mxu0
        %v1050 = vadd.f32 %v482, %v1049
        %v1051 = vpop.f32.mrf.mxu0
        %v1052 = vpop.f32.mrf.mxu0
        %v1053 = vadd.f32 %v482, %v1052
        %v1054 = vpop.f32.mrf.mxu0
        %1055 = vmatprep.mubr.bf16.mxu0 0
        %1056 = vmatmul.mubr.bf16.gmra.mxu0 %v565
        %v1057 = vpop.f32.mrf.mxu0
        %v1058 = vadd.f32 %v482, %v1057
        %v1059 = vpop.f32.mrf.mxu0
        %v1060 = vpop.f32.mrf.mxu0
        %v1061 = vadd.f32 %v482, %v1060
        %v1062 = vpop.f32.mrf.mxu0
        %1063 = vdwg.mxu0
        %v1064 = vld [vmem:[#allocation8] sm:$0xff]
        %v1065 = vld [vmem:[#allocation8 + $0x8] sm:$0xff]
        %v1066 = vld [vmem:[#allocation8 + $0x10] sm:$0xff]
        %v1067 = vld [vmem:[#allocation8 + $0x18] sm:$0xff]
        %v1068 = vld [vmem:[#allocation8 + $0x20] sm:$0xff]
        %v1069 = vld [vmem:[#allocation8 + $0x28] sm:$0xff]
        %v1070 = vld [vmem:[#allocation8 + $0x30] sm:$0xff]
        %v1071 = vld [vmem:[#allocation8 + $0x38] sm:$0xff]
        %v1072 = vld [vmem:[#allocation8 + $0x40] sm:$0xff]
        %v1073 = vld [vmem:[#allocation8 + $0x48] sm:$0xff]
        %v1074 = vld [vmem:[#allocation8 + $0x50] sm:$0xff]
        %v1075 = vld [vmem:[#allocation8 + $0x58] sm:$0xff]
        %v1076 = vld [vmem:[#allocation8 + $0x60] sm:$0xff]
        %v1077 = vld [vmem:[#allocation8 + $0x68] sm:$0xff]
        %v1078 = vld [vmem:[#allocation8 + $0x70] sm:$0xff]
        %v1079 = vld [vmem:[#allocation8 + $0x78] sm:$0xff]
        %v1096 = vunpack.c.l.b16 %v1064
        %v1097 = vunpack.c.h.b16 %v1064
        %v1098 = vunpack.c.l.b16 %v1065
        %v1099 = vunpack.c.h.b16 %v1065
        %v1100 = vunpack.c.l.b16 %v1066
        %v1101 = vunpack.c.h.b16 %v1066
        %v1102 = vunpack.c.l.b16 %v1067
        %v1103 = vunpack.c.h.b16 %v1067
        %v1104 = vunpack.c.l.b16 %v1068
        %v1105 = vunpack.c.h.b16 %v1068
        %v1106 = vunpack.c.l.b16 %v1069
        %v1107 = vunpack.c.h.b16 %v1069
        %v1108 = vunpack.c.l.b16 %v1070
        %v1109 = vunpack.c.h.b16 %v1070
        %v1110 = vunpack.c.l.b16 %v1071
        %v1111 = vunpack.c.h.b16 %v1071
        %v1112 = vunpack.c.l.b16 %v1072
        %v1113 = vunpack.c.h.b16 %v1072
        %v1114 = vunpack.c.l.b16 %v1073
        %v1115 = vunpack.c.h.b16 %v1073
        %v1116 = vunpack.c.l.b16 %v1074
        %v1117 = vunpack.c.h.b16 %v1074
        %v1118 = vunpack.c.l.b16 %v1075
        %v1119 = vunpack.c.h.b16 %v1075
        %v1120 = vunpack.c.l.b16 %v1076
        %v1121 = vunpack.c.h.b16 %v1076
        %v1122 = vunpack.c.l.b16 %v1077
        %v1123 = vunpack.c.h.b16 %v1077
        %v1124 = vunpack.c.l.b16 %v1078
        %v1125 = vunpack.c.h.b16 %v1078
        %v1126 = vunpack.c.l.b16 %v1079
        %v1127 = vunpack.c.h.b16 %v1079
        %v1128 = vpack.c.b16 %v1098, %v1096
        %v1129 = vpack.c.b16 %v1099, %v1097
        %v1130 = vpack.c.b16 %v1102, %v1100
        %v1131 = vpack.c.b16 %v1103, %v1101
        %v1132 = vpack.c.b16 %v1106, %v1104
        %v1133 = vpack.c.b16 %v1107, %v1105
        %v1134 = vpack.c.b16 %v1110, %v1108
        %v1135 = vpack.c.b16 %v1111, %v1109
        %v1136 = vpack.c.b16 %v1114, %v1112
        %v1137 = vpack.c.b16 %v1115, %v1113
        %v1138 = vpack.c.b16 %v1118, %v1116
        %v1139 = vpack.c.b16 %v1119, %v1117
        %v1140 = vpack.c.b16 %v1122, %v1120
        %v1141 = vpack.c.b16 %v1123, %v1121
        %v1142 = vpack.c.b16 %v1126, %v1124
        %v1143 = vpack.c.b16 %v1127, %v1125
        %1160 = vmatprep.subr.bf16.mxu0 %v1143
        %1161 = vmatpush1.bf16.msra.mxu0 %v1142
        %1162 = vmatprep.subr.bf16.mxu0 %v1141
        %1163 = vmatpush1.bf16.msra.mxu0 %v1140
        %1164 = vmatprep.subr.bf16.mxu0 %v1139
        %1165 = vmatpush1.bf16.msra.mxu0 %v1138
        %1166 = vmatprep.subr.bf16.mxu0 %v1137
        %1167 = vmatpush1.bf16.msra.mxu0 %v1136
        %1168 = vmatprep.subr.bf16.mxu0 %v1135
        %1169 = vmatpush1.bf16.msra.mxu0 %v1134
        %1170 = vmatprep.subr.bf16.mxu0 %v1133
        %1171 = vmatpush1.bf16.msra.mxu0 %v1132
        %1172 = vmatprep.subr.bf16.mxu0 %v1131
        %1173 = vmatpush1.bf16.msra.mxu0 %v1130
        %1174 = vmatprep.subr.bf16.mxu0 %v1129
        %1175 = vmatpush1.bf16.msra.mxu0 %v1128
        %1176 = vmatprep.subr.bf16.mxu0 0
        %1177 = vmatpush2.bf16.msra.mxu0 0
        %1178 = vmatprep.subr.bf16.mxu0 0
        %1179 = vmatpush2.bf16.msra.mxu0 0
        %1180 = vmatprep.subr.bf16.mxu0 0
        %1181 = vmatpush2.bf16.msra.mxu0 0
        %1182 = vmatprep.subr.bf16.mxu0 0
        %1183 = vmatpush2.bf16.msra.mxu0 0
        %1184 = vmatprep.subr.bf16.mxu0 0
        %1185 = vmatpush2.bf16.msra.mxu0 0
        %1186 = vmatprep.subr.bf16.mxu0 0
        %1187 = vmatpush2.bf16.msra.mxu0 0
        %1188 = vmatprep.subr.bf16.mxu0 0
        %1189 = vmatpush2.bf16.msra.mxu0 0
        %1190 = vmatprep.subr.bf16.mxu0 0
        %1191 = vmatpush2.bf16.msra.mxu0 0
        %1192 = vmatprep.mubr.bf16.mxu0 0
        %1193 = vmatmul.mubr.bf16.gmra.mxu0 %v421
        %v1194 = vpop.f32.mrf.mxu0
        %v1195 = vadd.f32 0.0, %v1194
        %v1196 = vpop.f32.mrf.mxu0
        %v1197 = vadd.f32 0.0, %v1196
        %v1198 = vpop.f32.mrf.mxu0
        %v1199 = vadd.f32 0.0, %v1198
        %v1200 = vpop.f32.mrf.mxu0
        %v1201 = vadd.f32 0.0, %v1200
        %1202 = vmatprep.mubr.bf16.mxu0 0
        %1203 = vmatmul.mubr.bf16.gmra.mxu0 %v422
        %v1204 = vpop.f32.mrf.mxu0
        %v1205 = vadd.f32 0.0, %v1204
        %v1206 = vpop.f32.mrf.mxu0
        %v1207 = vadd.f32 0.0, %v1206
        %v1208 = vpop.f32.mrf.mxu0
        %v1209 = vadd.f32 0.0, %v1208
        %v1210 = vpop.f32.mrf.mxu0
        %v1211 = vadd.f32 0.0, %v1210
        %1212 = vmatprep.mubr.bf16.mxu0 0
        %1213 = vmatmul.mubr.bf16.gmra.mxu0 %v423
        %v1214 = vpop.f32.mrf.mxu0
        %v1215 = vadd.f32 0.0, %v1214
        %v1216 = vpop.f32.mrf.mxu0
        %v1217 = vadd.f32 0.0, %v1216
        %v1218 = vpop.f32.mrf.mxu0
        %v1219 = vadd.f32 0.0, %v1218
        %v1220 = vpop.f32.mrf.mxu0
        %v1221 = vadd.f32 0.0, %v1220
        %1222 = vmatprep.mubr.bf16.mxu0 0
        %1223 = vmatmul.mubr.bf16.gmra.mxu0 %v424
        %v1224 = vpop.f32.mrf.mxu0
        %v1225 = vadd.f32 0.0, %v1224
        %v1226 = vpop.f32.mrf.mxu0
        %v1227 = vadd.f32 0.0, %v1226
        %v1228 = vpop.f32.mrf.mxu0
        %v1229 = vadd.f32 0.0, %v1228
        %v1230 = vpop.f32.mrf.mxu0
        %v1231 = vadd.f32 0.0, %v1230
        %1232 = vmatprep.mubr.bf16.mxu0 0
        %1233 = vmatmul.mubr.bf16.gmra.mxu0 %v425
        %v1234 = vpop.f32.mrf.mxu0
        %v1235 = vadd.f32 0.0, %v1234
        %v1236 = vpop.f32.mrf.mxu0
        %v1237 = vadd.f32 0.0, %v1236
        %v1238 = vpop.f32.mrf.mxu0
        %v1239 = vadd.f32 0.0, %v1238
        %v1240 = vpop.f32.mrf.mxu0
        %v1241 = vadd.f32 0.0, %v1240
        %1242 = vmatprep.mubr.bf16.mxu0 0
        %1243 = vmatmul.mubr.bf16.gmra.mxu0 %v426
        %v1244 = vpop.f32.mrf.mxu0
        %v1245 = vadd.f32 0.0, %v1244
        %v1246 = vpop.f32.mrf.mxu0
        %v1247 = vadd.f32 0.0, %v1246
        %v1248 = vpop.f32.mrf.mxu0
        %v1249 = vadd.f32 0.0, %v1248
        %v1250 = vpop.f32.mrf.mxu0
        %v1251 = vadd.f32 0.0, %v1250
        %1252 = vmatprep.mubr.bf16.mxu0 0
        %1253 = vmatmul.mubr.bf16.gmra.mxu0 %v427
        %v1254 = vpop.f32.mrf.mxu0
        %v1255 = vadd.f32 0.0, %v1254
        %v1256 = vpop.f32.mrf.mxu0
        %v1257 = vadd.f32 0.0, %v1256
        %v1258 = vpop.f32.mrf.mxu0
        %v1259 = vadd.f32 0.0, %v1258
        %v1260 = vpop.f32.mrf.mxu0
        %v1261 = vadd.f32 0.0, %v1260
        %1262 = vmatprep.mubr.bf16.mxu0 0
        %1263 = vmatmul.mubr.bf16.gmra.mxu0 %v428
        %v1264 = vpop.f32.mrf.mxu0
        %v1265 = vadd.f32 0.0, %v1264
        %v1266 = vpop.f32.mrf.mxu0
        %v1267 = vadd.f32 0.0, %v1266
        %v1268 = vpop.f32.mrf.mxu0
        %v1269 = vadd.f32 0.0, %v1268
        %v1270 = vpop.f32.mrf.mxu0
        %v1271 = vadd.f32 0.0, %v1270
        %1272 = vmatprep.mubr.bf16.mxu0 0
        %1273 = vmatmul.mubr.bf16.gmra.mxu0 %v429
        %v1274 = vpop.f32.mrf.mxu0
        %v1275 = vadd.f32 0.0, %v1274
        %v1276 = vpop.f32.mrf.mxu0
        %v1277 = vadd.f32 0.0, %v1276
        %v1278 = vpop.f32.mrf.mxu0
        %v1279 = vadd.f32 0.0, %v1278
        %v1280 = vpop.f32.mrf.mxu0
        %v1281 = vadd.f32 0.0, %v1280
        %1282 = vmatprep.mubr.bf16.mxu0 0
        %1283 = vmatmul.mubr.bf16.gmra.mxu0 %v430
        %v1284 = vpop.f32.mrf.mxu0
        %v1285 = vadd.f32 0.0, %v1284
        %v1286 = vpop.f32.mrf.mxu0
        %v1287 = vadd.f32 0.0, %v1286
        %v1288 = vpop.f32.mrf.mxu0
        %v1289 = vadd.f32 0.0, %v1288
        %v1290 = vpop.f32.mrf.mxu0
        %v1291 = vadd.f32 0.0, %v1290
        %1292 = vmatprep.mubr.bf16.mxu0 0
        %1293 = vmatmul.mubr.bf16.gmra.mxu0 %v431
        %v1294 = vpop.f32.mrf.mxu0
        %v1295 = vadd.f32 0.0, %v1294
        %v1296 = vpop.f32.mrf.mxu0
        %v1297 = vadd.f32 0.0, %v1296
        %v1298 = vpop.f32.mrf.mxu0
        %v1299 = vadd.f32 0.0, %v1298
        %v1300 = vpop.f32.mrf.mxu0
        %v1301 = vadd.f32 0.0, %v1300
        %1302 = vmatprep.mubr.bf16.mxu0 0
        %1303 = vmatmul.mubr.bf16.gmra.mxu0 %v432
        %v1304 = vpop.f32.mrf.mxu0
        %v1305 = vadd.f32 0.0, %v1304
        %v1306 = vpop.f32.mrf.mxu0
        %v1307 = vadd.f32 0.0, %v1306
        %v1308 = vpop.f32.mrf.mxu0
        %v1309 = vadd.f32 0.0, %v1308
        %v1310 = vpop.f32.mrf.mxu0
        %v1311 = vadd.f32 0.0, %v1310
        %1312 = vmatprep.mubr.bf16.mxu0 0
        %1313 = vmatmul.mubr.bf16.gmra.mxu0 %v433
        %v1314 = vpop.f32.mrf.mxu0
        %v1315 = vadd.f32 0.0, %v1314
        %v1316 = vpop.f32.mrf.mxu0
        %v1317 = vadd.f32 0.0, %v1316
        %v1318 = vpop.f32.mrf.mxu0
        %v1319 = vadd.f32 0.0, %v1318
        %v1320 = vpop.f32.mrf.mxu0
        %v1321 = vadd.f32 0.0, %v1320
        %1322 = vmatprep.mubr.bf16.mxu0 0
        %1323 = vmatmul.mubr.bf16.gmra.mxu0 %v434
        %v1324 = vpop.f32.mrf.mxu0
        %v1325 = vadd.f32 0.0, %v1324
        %v1326 = vpop.f32.mrf.mxu0
        %v1327 = vadd.f32 0.0, %v1326
        %v1328 = vpop.f32.mrf.mxu0
        %v1329 = vadd.f32 0.0, %v1328
        %v1330 = vpop.f32.mrf.mxu0
        %v1331 = vadd.f32 0.0, %v1330
        %1332 = vmatprep.mubr.bf16.mxu0 0
        %1333 = vmatmul.mubr.bf16.gmra.mxu0 %v435
        %v1334 = vpop.f32.mrf.mxu0
        %v1335 = vadd.f32 0.0, %v1334
        %v1336 = vpop.f32.mrf.mxu0
        %v1337 = vadd.f32 0.0, %v1336
        %v1338 = vpop.f32.mrf.mxu0
        %v1339 = vadd.f32 0.0, %v1338
        %v1340 = vpop.f32.mrf.mxu0
        %v1341 = vadd.f32 0.0, %v1340
        %1342 = vmatprep.mubr.bf16.mxu0 0
        %1343 = vmatmul.mubr.bf16.gmra.mxu0 %v436
        %v1344 = vpop.f32.mrf.mxu0
        %v1345 = vadd.f32 0.0, %v1344
        %v1346 = vpop.f32.mrf.mxu0
        %v1347 = vadd.f32 0.0, %v1346
        %v1348 = vpop.f32.mrf.mxu0
        %v1349 = vadd.f32 0.0, %v1348
        %v1350 = vpop.f32.mrf.mxu0
        %v1351 = vadd.f32 0.0, %v1350
        %1352 = vdwg.mxu0
        %v1353 = vadd.f32 %v745, %v1195
        %v1354 = vadd.f32 %v747, %v1197
        %v1355 = vadd.f32 %v749, %v1199
        %v1356 = vadd.f32 %v751, %v1201
        %v1357 = vadd.f32 %v755, %v1205
        %v1358 = vadd.f32 %v757, %v1207
        %v1359 = vadd.f32 %v759, %v1209
        %v1360 = vadd.f32 %v761, %v1211
        %v1361 = vadd.f32 %v765, %v1215
        %v1362 = vadd.f32 %v767, %v1217
        %v1363 = vadd.f32 %v769, %v1219
        %v1364 = vadd.f32 %v771, %v1221
        %v1365 = vadd.f32 %v775, %v1225
        %v1366 = vadd.f32 %v777, %v1227
        %v1367 = vadd.f32 %v779, %v1229
        %v1368 = vadd.f32 %v781, %v1231
        %v1369 = vadd.f32 %v785, %v1235
        %v1370 = vadd.f32 %v787, %v1237
        %v1371 = vadd.f32 %v789, %v1239
        %v1372 = vadd.f32 %v791, %v1241
        %v1373 = vadd.f32 %v795, %v1245
        %v1374 = vadd.f32 %v797, %v1247
        %v1375 = vadd.f32 %v799, %v1249
        %v1376 = vadd.f32 %v801, %v1251
        %v1377 = vadd.f32 %v805, %v1255
        %v1378 = vadd.f32 %v807, %v1257
        %v1379 = vadd.f32 %v809, %v1259
        %v1380 = vadd.f32 %v811, %v1261
        %v1381 = vadd.f32 %v815, %v1265
        %v1382 = vadd.f32 %v817, %v1267
        %v1383 = vadd.f32 %v819, %v1269
        %v1384 = vadd.f32 %v821, %v1271
        %v1385 = vadd.f32 %v825, %v1275
        %v1386 = vadd.f32 %v827, %v1277
        %v1387 = vadd.f32 %v829, %v1279
        %v1388 = vadd.f32 %v831, %v1281
        %v1389 = vadd.f32 %v835, %v1285
        %v1390 = vadd.f32 %v837, %v1287
        %v1391 = vadd.f32 %v839, %v1289
        %v1392 = vadd.f32 %v841, %v1291
        %v1393 = vadd.f32 %v845, %v1295
        %v1394 = vadd.f32 %v847, %v1297
        %v1395 = vadd.f32 %v849, %v1299
        %v1396 = vadd.f32 %v851, %v1301
        %v1397 = vadd.f32 %v855, %v1305
        %v1398 = vadd.f32 %v857, %v1307
        %v1399 = vadd.f32 %v859, %v1309
        %v1400 = vadd.f32 %v861, %v1311
        %v1401 = vadd.f32 %v865, %v1315
        %v1402 = vadd.f32 %v867, %v1317
        %v1403 = vadd.f32 %v869, %v1319
        %v1404 = vadd.f32 %v871, %v1321
        %v1405 = vadd.f32 %v875, %v1325
        %v1406 = vadd.f32 %v877, %v1327
        %v1407 = vadd.f32 %v879, %v1329
        %v1408 = vadd.f32 %v881, %v1331
        %v1409 = vadd.f32 %v885, %v1335
        %v1410 = vadd.f32 %v887, %v1337
        %v1411 = vadd.f32 %v889, %v1339
        %v1412 = vadd.f32 %v891, %v1341
        %v1413 = vadd.f32 %v895, %v1345
        %v1414 = vadd.f32 %v897, %v1347
        %v1415 = vadd.f32 %v899, %v1349
        %v1416 = vadd.f32 %v901, %v1351
        %v1417 = vxor.u32 %v1353, 2147483648
        %v1418 = vxor.u32 %v1354, 2147483648
        %v1419 = vxor.u32 %v1355, 2147483648
        %v1420 = vxor.u32 %v1356, 2147483648
        %v1421 = vxor.u32 %v1357, 2147483648
        %v1422 = vxor.u32 %v1358, 2147483648
        %v1423 = vxor.u32 %v1359, 2147483648
        %v1424 = vxor.u32 %v1360, 2147483648
        %v1425 = vxor.u32 %v1361, 2147483648
        %v1426 = vxor.u32 %v1362, 2147483648
        %v1427 = vxor.u32 %v1363, 2147483648
        %v1428 = vxor.u32 %v1364, 2147483648
        %v1429 = vxor.u32 %v1365, 2147483648
        %v1430 = vxor.u32 %v1366, 2147483648
        %v1431 = vxor.u32 %v1367, 2147483648
        %v1432 = vxor.u32 %v1368, 2147483648
        %v1433 = vxor.u32 %v1369, 2147483648
        %v1434 = vxor.u32 %v1370, 2147483648
        %v1435 = vxor.u32 %v1371, 2147483648
        %v1436 = vxor.u32 %v1372, 2147483648
        %v1437 = vxor.u32 %v1373, 2147483648
        %v1438 = vxor.u32 %v1374, 2147483648
        %v1439 = vxor.u32 %v1375, 2147483648
        %v1440 = vxor.u32 %v1376, 2147483648
        %v1441 = vxor.u32 %v1377, 2147483648
        %v1442 = vxor.u32 %v1378, 2147483648
        %v1443 = vxor.u32 %v1379, 2147483648
        %v1444 = vxor.u32 %v1380, 2147483648
        %v1445 = vxor.u32 %v1381, 2147483648
        %v1446 = vxor.u32 %v1382, 2147483648
        %v1447 = vxor.u32 %v1383, 2147483648
        %v1448 = vxor.u32 %v1384, 2147483648
        %v1449 = vxor.u32 %v1385, 2147483648
        %v1450 = vxor.u32 %v1386, 2147483648
        %v1451 = vxor.u32 %v1387, 2147483648
        %v1452 = vxor.u32 %v1388, 2147483648
        %v1453 = vxor.u32 %v1389, 2147483648
        %v1454 = vxor.u32 %v1390, 2147483648
        %v1455 = vxor.u32 %v1391, 2147483648
        %v1456 = vxor.u32 %v1392, 2147483648
        %v1457 = vxor.u32 %v1393, 2147483648
        %v1458 = vxor.u32 %v1394, 2147483648
        %v1459 = vxor.u32 %v1395, 2147483648
        %v1460 = vxor.u32 %v1396, 2147483648
        %v1461 = vxor.u32 %v1397, 2147483648
        %v1462 = vxor.u32 %v1398, 2147483648
        %v1463 = vxor.u32 %v1399, 2147483648
        %v1464 = vxor.u32 %v1400, 2147483648
        %v1465 = vxor.u32 %v1401, 2147483648
        %v1466 = vxor.u32 %v1402, 2147483648
        %v1467 = vxor.u32 %v1403, 2147483648
        %v1468 = vxor.u32 %v1404, 2147483648
        %v1469 = vxor.u32 %v1405, 2147483648
        %v1470 = vxor.u32 %v1406, 2147483648
        %v1471 = vxor.u32 %v1407, 2147483648
        %v1472 = vxor.u32 %v1408, 2147483648
        %v1473 = vxor.u32 %v1409, 2147483648
        %v1474 = vxor.u32 %v1410, 2147483648
        %v1475 = vxor.u32 %v1411, 2147483648
        %v1476 = vxor.u32 %v1412, 2147483648
        %v1477 = vxor.u32 %v1413, 2147483648
        %v1478 = vxor.u32 %v1414, 2147483648
        %v1479 = vxor.u32 %v1415, 2147483648
        %v1480 = vxor.u32 %v1416, 2147483648
        %v1481 = vmul.f32 %v1417, 1.442695
        %v1482 = vpow.pop %v1481
        %v1483 = vmul.f32 %v1418, 1.442695
        %v1484 = vpow.pop %v1483
        %v1485 = vmul.f32 %v1419, 1.442695
        %v1486 = vpow.pop %v1485
        %v1487 = vmul.f32 %v1420, 1.442695
        %v1488 = vpow.pop %v1487
        %v1489 = vmul.f32 %v1421, 1.442695
        %v1490 = vpow.pop %v1489
        %v1491 = vmul.f32 %v1422, 1.442695
        %v1492 = vpow.pop %v1491
        %v1493 = vmul.f32 %v1423, 1.442695
        %v1494 = vpow.pop %v1493
        %v1495 = vmul.f32 %v1424, 1.442695
        %v1496 = vpow.pop %v1495
        %v1497 = vmul.f32 %v1425, 1.442695
        %v1498 = vpow.pop %v1497
        %v1499 = vmul.f32 %v1426, 1.442695
        %v1500 = vpow.pop %v1499
        %v1501 = vmul.f32 %v1427, 1.442695
        %v1502 = vpow.pop %v1501
        %v1503 = vmul.f32 %v1428, 1.442695
        %v1504 = vpow.pop %v1503
        %v1505 = vmul.f32 %v1429, 1.442695
        %v1506 = vpow.pop %v1505
        %v1507 = vmul.f32 %v1430, 1.442695
        %v1508 = vpow.pop %v1507
        %v1509 = vmul.f32 %v1431, 1.442695
        %v1510 = vpow.pop %v1509
        %v1511 = vmul.f32 %v1432, 1.442695
        %v1512 = vpow.pop %v1511
        %v1513 = vmul.f32 %v1433, 1.442695
        %v1514 = vpow.pop %v1513
        %v1515 = vmul.f32 %v1434, 1.442695
        %v1516 = vpow.pop %v1515
        %v1517 = vmul.f32 %v1435, 1.442695
        %v1518 = vpow.pop %v1517
        %v1519 = vmul.f32 %v1436, 1.442695
        %v1520 = vpow.pop %v1519
        %v1521 = vmul.f32 %v1437, 1.442695
        %v1522 = vpow.pop %v1521
        %v1523 = vmul.f32 %v1438, 1.442695
        %v1524 = vpow.pop %v1523
        %v1525 = vmul.f32 %v1439, 1.442695
        %v1526 = vpow.pop %v1525
        %v1527 = vmul.f32 %v1440, 1.442695
        %v1528 = vpow.pop %v1527
        %v1529 = vmul.f32 %v1441, 1.442695
        %v1530 = vpow.pop %v1529
        %v1531 = vmul.f32 %v1442, 1.442695
        %v1532 = vpow.pop %v1531
        %v1533 = vmul.f32 %v1443, 1.442695
        %v1534 = vpow.pop %v1533
        %v1535 = vmul.f32 %v1444, 1.442695
        %v1536 = vpow.pop %v1535
        %v1537 = vmul.f32 %v1445, 1.442695
        %v1538 = vpow.pop %v1537
        %v1539 = vmul.f32 %v1446, 1.442695
        %v1540 = vpow.pop %v1539
        %v1541 = vmul.f32 %v1447, 1.442695
        %v1542 = vpow.pop %v1541
        %v1543 = vmul.f32 %v1448, 1.442695
        %v1544 = vpow.pop %v1543
        %v1545 = vmul.f32 %v1449, 1.442695
        %v1546 = vpow.pop %v1545
        %v1547 = vmul.f32 %v1450, 1.442695
        %v1548 = vpow.pop %v1547
        %v1549 = vmul.f32 %v1451, 1.442695
        %v1550 = vpow.pop %v1549
        %v1551 = vmul.f32 %v1452, 1.442695
        %v1552 = vpow.pop %v1551
        %v1553 = vmul.f32 %v1453, 1.442695
        %v1554 = vpow.pop %v1553
        %v1555 = vmul.f32 %v1454, 1.442695
        %v1556 = vpow.pop %v1555
        %v1557 = vmul.f32 %v1455, 1.442695
        %v1558 = vpow.pop %v1557
        %v1559 = vmul.f32 %v1456, 1.442695
        %v1560 = vpow.pop %v1559
        %v1561 = vmul.f32 %v1457, 1.442695
        %v1562 = vpow.pop %v1561
        %v1563 = vmul.f32 %v1458, 1.442695
        %v1564 = vpow.pop %v1563
        %v1565 = vmul.f32 %v1459, 1.442695
        %v1566 = vpow.pop %v1565
        %v1567 = vmul.f32 %v1460, 1.442695
        %v1568 = vpow.pop %v1567
        %v1569 = vmul.f32 %v1461, 1.442695
        %v1570 = vpow.pop %v1569
        %v1571 = vmul.f32 %v1462, 1.442695
        %v1572 = vpow.pop %v1571
        %v1573 = vmul.f32 %v1463, 1.442695
        %v1574 = vpow.pop %v1573
        %v1575 = vmul.f32 %v1464, 1.442695
        %v1576 = vpow.pop %v1575
        %v1577 = vmul.f32 %v1465, 1.442695
        %v1578 = vpow.pop %v1577
        %v1579 = vmul.f32 %v1466, 1.442695
        %v1580 = vpow.pop %v1579
        %v1581 = vmul.f32 %v1467, 1.442695
        %v1582 = vpow.pop %v1581
        %v1583 = vmul.f32 %v1468, 1.442695
        %v1584 = vpow.pop %v1583
        %v1585 = vmul.f32 %v1469, 1.442695
        %v1586 = vpow.pop %v1585
        %v1587 = vmul.f32 %v1470, 1.442695
        %v1588 = vpow.pop %v1587
        %v1589 = vmul.f32 %v1471, 1.442695
        %v1590 = vpow.pop %v1589
        %v1591 = vmul.f32 %v1472, 1.442695
        %v1592 = vpow.pop %v1591
        %v1593 = vmul.f32 %v1473, 1.442695
        %v1594 = vpow.pop %v1593
        %v1595 = vmul.f32 %v1474, 1.442695
        %v1596 = vpow.pop %v1595
        %v1597 = vmul.f32 %v1475, 1.442695
        %v1598 = vpow.pop %v1597
        %v1599 = vmul.f32 %v1476, 1.442695
        %v1600 = vpow.pop %v1599
        %v1601 = vmul.f32 %v1477, 1.442695
        %v1602 = vpow.pop %v1601
        %v1603 = vmul.f32 %v1478, 1.442695
        %v1604 = vpow.pop %v1603
        %v1605 = vmul.f32 %v1479, 1.442695
        %v1606 = vpow.pop %v1605
        %v1607 = vmul.f32 %v1480, 1.442695
        %v1608 = vpow.pop %v1607
        %v1609 = vadd.f32 %v1482, 1.0
        %v1610 = vadd.f32 %v1484, 1.0
        %v1611 = vadd.f32 %v1486, 1.0
        %v1612 = vadd.f32 %v1488, 1.0
        %v1613 = vadd.f32 %v1490, 1.0
        %v1614 = vadd.f32 %v1492, 1.0
        %v1615 = vadd.f32 %v1494, 1.0
        %v1616 = vadd.f32 %v1496, 1.0
        %v1617 = vadd.f32 %v1498, 1.0
        %v1618 = vadd.f32 %v1500, 1.0
        %v1619 = vadd.f32 %v1502, 1.0
        %v1620 = vadd.f32 %v1504, 1.0
        %v1621 = vadd.f32 %v1506, 1.0
        %v1622 = vadd.f32 %v1508, 1.0
        %v1623 = vadd.f32 %v1510, 1.0
        %v1624 = vadd.f32 %v1512, 1.0
        %v1625 = vadd.f32 %v1514, 1.0
        %v1626 = vadd.f32 %v1516, 1.0
        %v1627 = vadd.f32 %v1518, 1.0
        %v1628 = vadd.f32 %v1520, 1.0
        %v1629 = vadd.f32 %v1522, 1.0
        %v1630 = vadd.f32 %v1524, 1.0
        %v1631 = vadd.f32 %v1526, 1.0
        %v1632 = vadd.f32 %v1528, 1.0
        %v1633 = vadd.f32 %v1530, 1.0
        %v1634 = vadd.f32 %v1532, 1.0
        %v1635 = vadd.f32 %v1534, 1.0
        %v1636 = vadd.f32 %v1536, 1.0
        %v1637 = vadd.f32 %v1538, 1.0
        %v1638 = vadd.f32 %v1540, 1.0
        %v1639 = vadd.f32 %v1542, 1.0
        %v1640 = vadd.f32 %v1544, 1.0
        %v1641 = vadd.f32 %v1546, 1.0
        %v1642 = vadd.f32 %v1548, 1.0
        %v1643 = vadd.f32 %v1550, 1.0
        %v1644 = vadd.f32 %v1552, 1.0
        %v1645 = vadd.f32 %v1554, 1.0
        %v1646 = vadd.f32 %v1556, 1.0
        %v1647 = vadd.f32 %v1558, 1.0
        %v1648 = vadd.f32 %v1560, 1.0
        %v1649 = vadd.f32 %v1562, 1.0
        %v1650 = vadd.f32 %v1564, 1.0
        %v1651 = vadd.f32 %v1566, 1.0
        %v1652 = vadd.f32 %v1568, 1.0
        %v1653 = vadd.f32 %v1570, 1.0
        %v1654 = vadd.f32 %v1572, 1.0
        %v1655 = vadd.f32 %v1574, 1.0
        %v1656 = vadd.f32 %v1576, 1.0
        %v1657 = vadd.f32 %v1578, 1.0
        %v1658 = vadd.f32 %v1580, 1.0
        %v1659 = vadd.f32 %v1582, 1.0
        %v1660 = vadd.f32 %v1584, 1.0
        %v1661 = vadd.f32 %v1586, 1.0
        %v1662 = vadd.f32 %v1588, 1.0
        %v1663 = vadd.f32 %v1590, 1.0
        %v1664 = vadd.f32 %v1592, 1.0
        %v1665 = vadd.f32 %v1594, 1.0
        %v1666 = vadd.f32 %v1596, 1.0
        %v1667 = vadd.f32 %v1598, 1.0
        %v1668 = vadd.f32 %v1600, 1.0
        %v1669 = vadd.f32 %v1602, 1.0
        %v1670 = vadd.f32 %v1604, 1.0
        %v1671 = vadd.f32 %v1606, 1.0
        %v1672 = vadd.f32 %v1608, 1.0
        %v1673 = vrcp.pop %v1609
        %v1674 = vmul.f32 1.0, %v1673
        %v1675 = vrcp.pop %v1610
        %v1676 = vmul.f32 1.0, %v1675
        %v1677 = vrcp.pop %v1611
        %v1678 = vmul.f32 1.0, %v1677
        %v1679 = vrcp.pop %v1612
        %v1680 = vmul.f32 1.0, %v1679
        %v1681 = vrcp.pop %v1613
        %v1682 = vmul.f32 1.0, %v1681
        %v1683 = vrcp.pop %v1614
        %v1684 = vmul.f32 1.0, %v1683
        %v1685 = vrcp.pop %v1615
        %v1686 = vmul.f32 1.0, %v1685
        %v1687 = vrcp.pop %v1616
        %v1688 = vmul.f32 1.0, %v1687
        %v1689 = vrcp.pop %v1617
        %v1690 = vmul.f32 1.0, %v1689
        %v1691 = vrcp.pop %v1618
        %v1692 = vmul.f32 1.0, %v1691
        %v1693 = vrcp.pop %v1619
        %v1694 = vmul.f32 1.0, %v1693
        %v1695 = vrcp.pop %v1620
        %v1696 = vmul.f32 1.0, %v1695
        %v1697 = vrcp.pop %v1621
        %v1698 = vmul.f32 1.0, %v1697
        %v1699 = vrcp.pop %v1622
        %v1700 = vmul.f32 1.0, %v1699
        %v1701 = vrcp.pop %v1623
        %v1702 = vmul.f32 1.0, %v1701
        %v1703 = vrcp.pop %v1624
        %v1704 = vmul.f32 1.0, %v1703
        %v1705 = vrcp.pop %v1625
        %v1706 = vmul.f32 1.0, %v1705
        %v1707 = vrcp.pop %v1626
        %v1708 = vmul.f32 1.0, %v1707
        %v1709 = vrcp.pop %v1627
        %v1710 = vmul.f32 1.0, %v1709
        %v1711 = vrcp.pop %v1628
        %v1712 = vmul.f32 1.0, %v1711
        %v1713 = vrcp.pop %v1629
        %v1714 = vmul.f32 1.0, %v1713
        %v1715 = vrcp.pop %v1630
        %v1716 = vmul.f32 1.0, %v1715
        %v1717 = vrcp.pop %v1631
        %v1718 = vmul.f32 1.0, %v1717
        %v1719 = vrcp.pop %v1632
        %v1720 = vmul.f32 1.0, %v1719
        %v1721 = vrcp.pop %v1633
        %v1722 = vmul.f32 1.0, %v1721
        %v1723 = vrcp.pop %v1634
        %v1724 = vmul.f32 1.0, %v1723
        %v1725 = vrcp.pop %v1635
        %v1726 = vmul.f32 1.0, %v1725
        %v1727 = vrcp.pop %v1636
        %v1728 = vmul.f32 1.0, %v1727
        %v1729 = vrcp.pop %v1637
        %v1730 = vmul.f32 1.0, %v1729
        %v1731 = vrcp.pop %v1638
        %v1732 = vmul.f32 1.0, %v1731
        %v1733 = vrcp.pop %v1639
        %v1734 = vmul.f32 1.0, %v1733
        %v1735 = vrcp.pop %v1640
        %v1736 = vmul.f32 1.0, %v1735
        %v1737 = vrcp.pop %v1641
        %v1738 = vmul.f32 1.0, %v1737
        %v1739 = vrcp.pop %v1642
        %v1740 = vmul.f32 1.0, %v1739
        %v1741 = vrcp.pop %v1643
        %v1742 = vmul.f32 1.0, %v1741
        %v1743 = vrcp.pop %v1644
        %v1744 = vmul.f32 1.0, %v1743
        %v1745 = vrcp.pop %v1645
        %v1746 = vmul.f32 1.0, %v1745
        %v1747 = vrcp.pop %v1646
        %v1748 = vmul.f32 1.0, %v1747
        %v1749 = vrcp.pop %v1647
        %v1750 = vmul.f32 1.0, %v1749
        %v1751 = vrcp.pop %v1648
        %v1752 = vmul.f32 1.0, %v1751
        %v1753 = vrcp.pop %v1649
        %v1754 = vmul.f32 1.0, %v1753
        %v1755 = vrcp.pop %v1650
        %v1756 = vmul.f32 1.0, %v1755
        %v1757 = vrcp.pop %v1651
        %v1758 = vmul.f32 1.0, %v1757
        %v1759 = vrcp.pop %v1652
        %v1760 = vmul.f32 1.0, %v1759
        %v1761 = vrcp.pop %v1653
        %v1762 = vmul.f32 1.0, %v1761
        %v1763 = vrcp.pop %v1654
        %v1764 = vmul.f32 1.0, %v1763
        %v1765 = vrcp.pop %v1655
        %v1766 = vmul.f32 1.0, %v1765
        %v1767 = vrcp.pop %v1656
        %v1768 = vmul.f32 1.0, %v1767
        %v1769 = vrcp.pop %v1657
        %v1770 = vmul.f32 1.0, %v1769
        %v1771 = vrcp.pop %v1658
        %v1772 = vmul.f32 1.0, %v1771
        %v1773 = vrcp.pop %v1659
        %v1774 = vmul.f32 1.0, %v1773
        %v1775 = vrcp.pop %v1660
        %v1776 = vmul.f32 1.0, %v1775
        %v1777 = vrcp.pop %v1661
        %v1778 = vmul.f32 1.0, %v1777
        %v1779 = vrcp.pop %v1662
        %v1780 = vmul.f32 1.0, %v1779
        %v1781 = vrcp.pop %v1663
        %v1782 = vmul.f32 1.0, %v1781
        %v1783 = vrcp.pop %v1664
        %v1784 = vmul.f32 1.0, %v1783
        %v1785 = vrcp.pop %v1665
        %v1786 = vmul.f32 1.0, %v1785
        %v1787 = vrcp.pop %v1666
        %v1788 = vmul.f32 1.0, %v1787
        %v1789 = vrcp.pop %v1667
        %v1790 = vmul.f32 1.0, %v1789
        %v1791 = vrcp.pop %v1668
        %v1792 = vmul.f32 1.0, %v1791
        %v1793 = vrcp.pop %v1669
        %v1794 = vmul.f32 1.0, %v1793
        %v1795 = vrcp.pop %v1670
        %v1796 = vmul.f32 1.0, %v1795
        %v1797 = vrcp.pop %v1671
        %v1798 = vmul.f32 1.0, %v1797
        %v1799 = vrcp.pop %v1672
        %v1800 = vmul.f32 1.0, %v1799
        %v1801 = vmul.f32 %v1676, %v389
        %v1802 = vmul.f32 %v1680, %v390
        %v1803 = vmul.f32 %v1684, %v391
        %v1804 = vmul.f32 %v1688, %v392
        %v1805 = vmul.f32 %v1692, %v393
        %v1806 = vmul.f32 %v1696, %v394
        %v1807 = vmul.f32 %v1700, %v395
        %v1808 = vmul.f32 %v1704, %v396
        %v1809 = vmul.f32 %v1708, %v397
        %v1810 = vmul.f32 %v1712, %v398
        %v1811 = vmul.f32 %v1716, %v399
        %v1812 = vmul.f32 %v1720, %v400
        %v1813 = vmul.f32 %v1724, %v401
        %v1814 = vmul.f32 %v1728, %v402
        %v1815 = vmul.f32 %v1732, %v403
        %v1816 = vmul.f32 %v1736, %v404
        %v1817 = vmul.f32 %v1740, %v405
        %v1818 = vmul.f32 %v1744, %v406
        %v1819 = vmul.f32 %v1748, %v407
        %v1820 = vmul.f32 %v1752, %v408
        %v1821 = vmul.f32 %v1756, %v409
        %v1822 = vmul.f32 %v1760, %v410
        %v1823 = vmul.f32 %v1764, %v411
        %v1824 = vmul.f32 %v1768, %v412
        %v1825 = vmul.f32 %v1772, %v413
        %v1826 = vmul.f32 %v1776, %v414
        %v1827 = vmul.f32 %v1780, %v415
        %v1828 = vmul.f32 %v1784, %v416
        %v1829 = vmul.f32 %v1788, %v417
        %v1830 = vmul.f32 %v1792, %v418
        %v1831 = vmul.f32 %v1796, %v419
        %v1832 = vmul.f32 %v1800, %v420
        %v1833 = vpack.c.bf16 %v1802, %v1801
        %v1834 = vpack.c.bf16 %v1804, %v1803
        %v1835 = vpack.c.bf16 %v1806, %v1805
        %v1836 = vpack.c.bf16 %v1808, %v1807
        %v1837 = vpack.c.bf16 %v1810, %v1809
        %v1838 = vpack.c.bf16 %v1812, %v1811
        %v1839 = vpack.c.bf16 %v1814, %v1813
        %v1840 = vpack.c.bf16 %v1816, %v1815
        %v1841 = vpack.c.bf16 %v1818, %v1817
        %v1842 = vpack.c.bf16 %v1820, %v1819
        %v1843 = vpack.c.bf16 %v1822, %v1821
        %v1844 = vpack.c.bf16 %v1824, %v1823
        %v1845 = vpack.c.bf16 %v1826, %v1825
        %v1846 = vpack.c.bf16 %v1828, %v1827
        %v1847 = vpack.c.bf16 %v1830, %v1829
        %v1848 = vpack.c.bf16 %v1832, %v1831
        %v1849 = vld [vmem:[#allocation10] sm:$0xf]
        %v1850 = vld [vmem:[#allocation10 + $0x4] sm:$0xf]
        %v1851 = vld [vmem:[#allocation10 + $0x8] sm:$0xf]
        %v1852 = vld [vmem:[#allocation10 + $0xc] sm:$0xf]
        %v1853 = vld [vmem:[#allocation10 + $0x10] sm:$0xf]
        %v1854 = vld [vmem:[#allocation10 + $0x14] sm:$0xf]
        %v1855 = vld [vmem:[#allocation10 + $0x18] sm:$0xf]
        %v1856 = vld [vmem:[#allocation10 + $0x1c] sm:$0xf]
        %v1857 = vld [vmem:[#allocation10 + $0x20] sm:$0xf]
        %v1858 = vld [vmem:[#allocation10 + $0x24] sm:$0xf]
        %v1859 = vld [vmem:[#allocation10 + $0x28] sm:$0xf]
        %v1860 = vld [vmem:[#allocation10 + $0x2c] sm:$0xf]
        %v1861 = vld [vmem:[#allocation10 + $0x30] sm:$0xf]
        %v1862 = vld [vmem:[#allocation10 + $0x34] sm:$0xf]
        %v1863 = vld [vmem:[#allocation10 + $0x38] sm:$0xf]
        %v1864 = vld [vmem:[#allocation10 + $0x3c] sm:$0xf]
        %v1881 = vunpack.c.l.b16 %v1849
        %v1882 = vunpack.c.l.b16 %v1850
        %v1883 = vunpack.c.l.b16 %v1851
        %v1884 = vunpack.c.l.b16 %v1852
        %v1885 = vunpack.c.l.b16 %v1853
        %v1886 = vunpack.c.l.b16 %v1854
        %v1887 = vunpack.c.l.b16 %v1855
        %v1888 = vunpack.c.l.b16 %v1856
        %v1889 = vunpack.c.l.b16 %v1857
        %v1890 = vunpack.c.l.b16 %v1858
        %v1891 = vunpack.c.l.b16 %v1859
        %v1892 = vunpack.c.l.b16 %v1860
        %v1893 = vunpack.c.l.b16 %v1861
        %v1894 = vunpack.c.l.b16 %v1862
        %v1895 = vunpack.c.l.b16 %v1863
        %v1896 = vunpack.c.l.b16 %v1864
        %v1897 = vpack.c.b16 %v1882, %v1881
        %v1898 = vpack.c.b16 %v1884, %v1883
        %v1899 = vpack.c.b16 %v1886, %v1885
        %v1900 = vpack.c.b16 %v1888, %v1887
        %v1901 = vpack.c.b16 %v1890, %v1889
        %v1902 = vpack.c.b16 %v1892, %v1891
        %v1903 = vpack.c.b16 %v1894, %v1893
        %v1904 = vpack.c.b16 %v1896, %v1895
        %1913 = vmatprep.subr.bf16.mxu0 0
        %1914 = vmatpush1.bf16.msra.mxu0 %v1904
        %1915 = vmatprep.subr.bf16.mxu0 0
        %1916 = vmatpush1.bf16.msra.mxu0 %v1903
        %1917 = vmatprep.subr.bf16.mxu0 0
        %1918 = vmatpush1.bf16.msra.mxu0 %v1902
        %1919 = vmatprep.subr.bf16.mxu0 0
        %1920 = vmatpush1.bf16.msra.mxu0 %v1901
        %1921 = vmatprep.subr.bf16.mxu0 0
        %1922 = vmatpush1.bf16.msra.mxu0 %v1900
        %1923 = vmatprep.subr.bf16.mxu0 0
        %1924 = vmatpush1.bf16.msra.mxu0 %v1899
        %1925 = vmatprep.subr.bf16.mxu0 0
        %1926 = vmatpush1.bf16.msra.mxu0 %v1898
        %1927 = vmatprep.subr.bf16.mxu0 0
        %1928 = vmatpush1.bf16.msra.mxu0 %v1897
        %1929 = vmatprep.subr.bf16.mxu0 0
        %1930 = vmatpush2.bf16.msra.mxu0 0
        %1931 = vmatprep.subr.bf16.mxu0 0
        %1932 = vmatpush2.bf16.msra.mxu0 0
        %1933 = vmatprep.subr.bf16.mxu0 0
        %1934 = vmatpush2.bf16.msra.mxu0 0
        %1935 = vmatprep.subr.bf16.mxu0 0
        %1936 = vmatpush2.bf16.msra.mxu0 0
        %1937 = vmatprep.subr.bf16.mxu0 0
        %1938 = vmatpush2.bf16.msra.mxu0 0
        %1939 = vmatprep.subr.bf16.mxu0 0
        %1940 = vmatpush2.bf16.msra.mxu0 0
        %1941 = vmatprep.subr.bf16.mxu0 0
        %1942 = vmatpush2.bf16.msra.mxu0 0
        %1943 = vmatprep.subr.bf16.mxu0 0
        %1944 = vmatpush2.bf16.msra.mxu0 0
        %1945 = vmatprep.mubr.bf16.mxu0 0
        %1946 = vmatmul.mubr.bf16.gmra.mxu0 %v1833
        %v1947 = vpop.f32.mrf.mxu0
        %v1948 = vadd.f32 0.0, %v1947
        %v1949 = vpop.f32.mrf.mxu0
        %v1950 = vpop.f32.mrf.mxu0
        %v1951 = vadd.f32 0.0, %v1950
        %v1952 = vpop.f32.mrf.mxu0
        %1953 = vmatprep.mubr.bf16.mxu0 0
        %1954 = vmatmul.mubr.bf16.gmra.mxu0 %v1834
        %v1955 = vpop.f32.mrf.mxu0
        %v1956 = vadd.f32 0.0, %v1955
        %v1957 = vpop.f32.mrf.mxu0
        %v1958 = vpop.f32.mrf.mxu0
        %v1959 = vadd.f32 0.0, %v1958
        %v1960 = vpop.f32.mrf.mxu0
        %1961 = vmatprep.mubr.bf16.mxu0 0
        %1962 = vmatmul.mubr.bf16.gmra.mxu0 %v1835
        %v1963 = vpop.f32.mrf.mxu0
        %v1964 = vadd.f32 0.0, %v1963
        %v1965 = vpop.f32.mrf.mxu0
        %v1966 = vpop.f32.mrf.mxu0
        %v1967 = vadd.f32 0.0, %v1966
        %v1968 = vpop.f32.mrf.mxu0
        %1969 = vmatprep.mubr.bf16.mxu0 0
        %1970 = vmatmul.mubr.bf16.gmra.mxu0 %v1836
        %v1971 = vpop.f32.mrf.mxu0
        %v1972 = vadd.f32 0.0, %v1971
        %v1973 = vpop.f32.mrf.mxu0
        %v1974 = vpop.f32.mrf.mxu0
        %v1975 = vadd.f32 0.0, %v1974
        %v1976 = vpop.f32.mrf.mxu0
        %1977 = vmatprep.mubr.bf16.mxu0 0
        %1978 = vmatmul.mubr.bf16.gmra.mxu0 %v1837
        %v1979 = vpop.f32.mrf.mxu0
        %v1980 = vadd.f32 0.0, %v1979
        %v1981 = vpop.f32.mrf.mxu0
        %v1982 = vpop.f32.mrf.mxu0
        %v1983 = vadd.f32 0.0, %v1982
        %v1984 = vpop.f32.mrf.mxu0
        %1985 = vmatprep.mubr.bf16.mxu0 0
        %1986 = vmatmul.mubr.bf16.gmra.mxu0 %v1838
        %v1987 = vpop.f32.mrf.mxu0
        %v1988 = vadd.f32 0.0, %v1987
        %v1989 = vpop.f32.mrf.mxu0
        %v1990 = vpop.f32.mrf.mxu0
        %v1991 = vadd.f32 0.0, %v1990
        %v1992 = vpop.f32.mrf.mxu0
        %1993 = vmatprep.mubr.bf16.mxu0 0
        %1994 = vmatmul.mubr.bf16.gmra.mxu0 %v1839
        %v1995 = vpop.f32.mrf.mxu0
        %v1996 = vadd.f32 0.0, %v1995
        %v1997 = vpop.f32.mrf.mxu0
        %v1998 = vpop.f32.mrf.mxu0
        %v1999 = vadd.f32 0.0, %v1998
        %v2000 = vpop.f32.mrf.mxu0
        %2001 = vmatprep.mubr.bf16.mxu0 0
        %2002 = vmatmul.mubr.bf16.gmra.mxu0 %v1840
        %v2003 = vpop.f32.mrf.mxu0
        %v2004 = vadd.f32 0.0, %v2003
        %v2005 = vpop.f32.mrf.mxu0
        %v2006 = vpop.f32.mrf.mxu0
        %v2007 = vadd.f32 0.0, %v2006
        %v2008 = vpop.f32.mrf.mxu0
        %2009 = vmatprep.mubr.bf16.mxu0 0
        %2010 = vmatmul.mubr.bf16.gmra.mxu0 %v1841
        %v2011 = vpop.f32.mrf.mxu0
        %v2012 = vadd.f32 0.0, %v2011
        %v2013 = vpop.f32.mrf.mxu0
        %v2014 = vpop.f32.mrf.mxu0
        %v2015 = vadd.f32 0.0, %v2014
        %v2016 = vpop.f32.mrf.mxu0
        %2017 = vmatprep.mubr.bf16.mxu0 0
        %2018 = vmatmul.mubr.bf16.gmra.mxu0 %v1842
        %v2019 = vpop.f32.mrf.mxu0
        %v2020 = vadd.f32 0.0, %v2019
        %v2021 = vpop.f32.mrf.mxu0
        %v2022 = vpop.f32.mrf.mxu0
        %v2023 = vadd.f32 0.0, %v2022
        %v2024 = vpop.f32.mrf.mxu0
        %2025 = vmatprep.mubr.bf16.mxu0 0
        %2026 = vmatmul.mubr.bf16.gmra.mxu0 %v1843
        %v2027 = vpop.f32.mrf.mxu0
        %v2028 = vadd.f32 0.0, %v2027
        %v2029 = vpop.f32.mrf.mxu0
        %v2030 = vpop.f32.mrf.mxu0
        %v2031 = vadd.f32 0.0, %v2030
        %v2032 = vpop.f32.mrf.mxu0
        %2033 = vmatprep.mubr.bf16.mxu0 0
        %2034 = vmatmul.mubr.bf16.gmra.mxu0 %v1844
        %v2035 = vpop.f32.mrf.mxu0
        %v2036 = vadd.f32 0.0, %v2035
        %v2037 = vpop.f32.mrf.mxu0
        %v2038 = vpop.f32.mrf.mxu0
        %v2039 = vadd.f32 0.0, %v2038
        %v2040 = vpop.f32.mrf.mxu0
        %2041 = vmatprep.mubr.bf16.mxu0 0
        %2042 = vmatmul.mubr.bf16.gmra.mxu0 %v1845
        %v2043 = vpop.f32.mrf.mxu0
        %v2044 = vadd.f32 0.0, %v2043
        %v2045 = vpop.f32.mrf.mxu0
        %v2046 = vpop.f32.mrf.mxu0
        %v2047 = vadd.f32 0.0, %v2046
        %v2048 = vpop.f32.mrf.mxu0
        %2049 = vmatprep.mubr.bf16.mxu0 0
        %2050 = vmatmul.mubr.bf16.gmra.mxu0 %v1846
        %v2051 = vpop.f32.mrf.mxu0
        %v2052 = vadd.f32 0.0, %v2051
        %v2053 = vpop.f32.mrf.mxu0
        %v2054 = vpop.f32.mrf.mxu0
        %v2055 = vadd.f32 0.0, %v2054
        %v2056 = vpop.f32.mrf.mxu0
        %2057 = vmatprep.mubr.bf16.mxu0 0
        %2058 = vmatmul.mubr.bf16.gmra.mxu0 %v1847
        %v2059 = vpop.f32.mrf.mxu0
        %v2060 = vadd.f32 0.0, %v2059
        %v2061 = vpop.f32.mrf.mxu0
        %v2062 = vpop.f32.mrf.mxu0
        %v2063 = vadd.f32 0.0, %v2062
        %v2064 = vpop.f32.mrf.mxu0
        %2065 = vmatprep.mubr.bf16.mxu0 0
        %2066 = vmatmul.mubr.bf16.gmra.mxu0 %v1848
        %v2067 = vpop.f32.mrf.mxu0
        %v2068 = vadd.f32 0.0, %v2067
        %v2069 = vpop.f32.mrf.mxu0
        %v2070 = vpop.f32.mrf.mxu0
        %v2071 = vadd.f32 0.0, %v2070
        %v2072 = vpop.f32.mrf.mxu0
        %2073 = vdwg.mxu0
        %v2074 = vadd.f32 %v938, %v1948
        %v2075 = vadd.f32 %v941, %v1951
        %v2076 = vadd.f32 %v946, %v1956
        %v2077 = vadd.f32 %v949, %v1959
        %v2078 = vadd.f32 %v954, %v1964
        %v2079 = vadd.f32 %v957, %v1967
        %v2080 = vadd.f32 %v962, %v1972
        %v2081 = vadd.f32 %v965, %v1975
        %v2082 = vadd.f32 %v970, %v1980
        %v2083 = vadd.f32 %v973, %v1983
        %v2084 = vadd.f32 %v978, %v1988
        %v2085 = vadd.f32 %v981, %v1991
        %v2086 = vadd.f32 %v986, %v1996
        %v2087 = vadd.f32 %v989, %v1999
        %v2088 = vadd.f32 %v994, %v2004
        %v2089 = vadd.f32 %v997, %v2007
        %v2090 = vadd.f32 %v1002, %v2012
        %v2091 = vadd.f32 %v1005, %v2015
        %v2092 = vadd.f32 %v1010, %v2020
        %v2093 = vadd.f32 %v1013, %v2023
        %v2094 = vadd.f32 %v1018, %v2028
        %v2095 = vadd.f32 %v1021, %v2031
        %v2096 = vadd.f32 %v1026, %v2036
        %v2097 = vadd.f32 %v1029, %v2039
        %v2098 = vadd.f32 %v1034, %v2044
        %v2099 = vadd.f32 %v1037, %v2047
        %v2100 = vadd.f32 %v1042, %v2052
        %v2101 = vadd.f32 %v1045, %v2055
        %v2102 = vadd.f32 %v1050, %v2060
        %v2103 = vadd.f32 %v1053, %v2063
        %v2104 = vadd.f32 %v1058, %v2068
        %v2105 = vadd.f32 %v1061, %v2071
        %v2106 = vsub.f32 1.0, %v1674
        %v2107 = vsub.f32 1.0, %v1678
        %v2108 = vsub.f32 1.0, %v1682
        %v2109 = vsub.f32 1.0, %v1686
        %v2110 = vsub.f32 1.0, %v1690
        %v2111 = vsub.f32 1.0, %v1694
        %v2112 = vsub.f32 1.0, %v1698
        %v2113 = vsub.f32 1.0, %v1702
        %v2114 = vsub.f32 1.0, %v1706
        %v2115 = vsub.f32 1.0, %v1710
        %v2116 = vsub.f32 1.0, %v1714
        %v2117 = vsub.f32 1.0, %v1718
        %v2118 = vsub.f32 1.0, %v1722
        %v2119 = vsub.f32 1.0, %v1726
        %v2120 = vsub.f32 1.0, %v1730
        %v2121 = vsub.f32 1.0, %v1734
        %v2122 = vsub.f32 1.0, %v1738
        %v2123 = vsub.f32 1.0, %v1742
        %v2124 = vsub.f32 1.0, %v1746
        %v2125 = vsub.f32 1.0, %v1750
        %v2126 = vsub.f32 1.0, %v1754
        %v2127 = vsub.f32 1.0, %v1758
        %v2128 = vsub.f32 1.0, %v1762
        %v2129 = vsub.f32 1.0, %v1766
        %v2130 = vsub.f32 1.0, %v1770
        %v2131 = vsub.f32 1.0, %v1774
        %v2132 = vsub.f32 1.0, %v1778
        %v2133 = vsub.f32 1.0, %v1782
        %v2134 = vsub.f32 1.0, %v1786
        %v2135 = vsub.f32 1.0, %v1790
        %v2136 = vsub.f32 1.0, %v1794
        %v2137 = vsub.f32 1.0, %v1798
        %v2138 = vmul.f32 %v2106, %v389
        %v2139 = vmul.f32 %v2107, %v390
        %v2140 = vmul.f32 %v2108, %v391
        %v2141 = vmul.f32 %v2109, %v392
        %v2142 = vmul.f32 %v2110, %v393
        %v2143 = vmul.f32 %v2111, %v394
        %v2144 = vmul.f32 %v2112, %v395
        %v2145 = vmul.f32 %v2113, %v396
        %v2146 = vmul.f32 %v2114, %v397
        %v2147 = vmul.f32 %v2115, %v398
        %v2148 = vmul.f32 %v2116, %v399
        %v2149 = vmul.f32 %v2117, %v400
        %v2150 = vmul.f32 %v2118, %v401
        %v2151 = vmul.f32 %v2119, %v402
        %v2152 = vmul.f32 %v2120, %v403
        %v2153 = vmul.f32 %v2121, %v404
        %v2154 = vmul.f32 %v2122, %v405
        %v2155 = vmul.f32 %v2123, %v406
        %v2156 = vmul.f32 %v2124, %v407
        %v2157 = vmul.f32 %v2125, %v408
        %v2158 = vmul.f32 %v2126, %v409
        %v2159 = vmul.f32 %v2127, %v410
        %v2160 = vmul.f32 %v2128, %v411
        %v2161 = vmul.f32 %v2129, %v412
        %v2162 = vmul.f32 %v2130, %v413
        %v2163 = vmul.f32 %v2131, %v414
        %v2164 = vmul.f32 %v2132, %v415
        %v2165 = vmul.f32 %v2133, %v416
        %v2166 = vmul.f32 %v2134, %v417
        %v2167 = vmul.f32 %v2135, %v418
        %v2168 = vmul.f32 %v2136, %v419
        %v2169 = vmul.f32 %v2137, %v420
        %v2170 = vmul.f32 %v1674, %v2074
        %v2171 = vmul.f32 %v1678, %v2075
        %v2172 = vmul.f32 %v1682, %v2076
        %v2173 = vmul.f32 %v1686, %v2077
        %v2174 = vmul.f32 %v1690, %v2078
        %v2175 = vmul.f32 %v1694, %v2079
        %v2176 = vmul.f32 %v1698, %v2080
        %v2177 = vmul.f32 %v1702, %v2081
        %v2178 = vmul.f32 %v1706, %v2082
        %v2179 = vmul.f32 %v1710, %v2083
        %v2180 = vmul.f32 %v1714, %v2084
        %v2181 = vmul.f32 %v1718, %v2085
        %v2182 = vmul.f32 %v1722, %v2086
        %v2183 = vmul.f32 %v1726, %v2087
        %v2184 = vmul.f32 %v1730, %v2088
        %v2185 = vmul.f32 %v1734, %v2089
        %v2186 = vmul.f32 %v1738, %v2090
        %v2187 = vmul.f32 %v1742, %v2091
        %v2188 = vmul.f32 %v1746, %v2092
        %v2189 = vmul.f32 %v1750, %v2093
        %v2190 = vmul.f32 %v1754, %v2094
        %v2191 = vmul.f32 %v1758, %v2095
        %v2192 = vmul.f32 %v1762, %v2096
        %v2193 = vmul.f32 %v1766, %v2097
        %v2194 = vmul.f32 %v1770, %v2098
        %v2195 = vmul.f32 %v1774, %v2099
        %v2196 = vmul.f32 %v1778, %v2100
        %v2197 = vmul.f32 %v1782, %v2101
        %v2198 = vmul.f32 %v1786, %v2102
        %v2199 = vmul.f32 %v1790, %v2103
        %v2200 = vmul.f32 %v1794, %v2104
        %v2201 = vmul.f32 %v1798, %v2105
        %v2202 = vadd.f32 %v2138, %v2170
        %v2203 = vadd.f32 %v2139, %v2171
        %v2204 = vadd.f32 %v2140, %v2172
        %v2205 = vadd.f32 %v2141, %v2173
        %v2206 = vadd.f32 %v2142, %v2174
        %v2207 = vadd.f32 %v2143, %v2175
        %v2208 = vadd.f32 %v2144, %v2176
        %v2209 = vadd.f32 %v2145, %v2177
        %v2210 = vadd.f32 %v2146, %v2178
        %v2211 = vadd.f32 %v2147, %v2179
        %v2212 = vadd.f32 %v2148, %v2180
        %v2213 = vadd.f32 %v2149, %v2181
        %v2214 = vadd.f32 %v2150, %v2182
        %v2215 = vadd.f32 %v2151, %v2183
        %v2216 = vadd.f32 %v2152, %v2184
        %v2217 = vadd.f32 %v2153, %v2185
        %v2218 = vadd.f32 %v2154, %v2186
        %v2219 = vadd.f32 %v2155, %v2187
        %v2220 = vadd.f32 %v2156, %v2188
        %v2221 = vadd.f32 %v2157, %v2189
        %v2222 = vadd.f32 %v2158, %v2190
        %v2223 = vadd.f32 %v2159, %v2191
        %v2224 = vadd.f32 %v2160, %v2192
        %v2225 = vadd.f32 %v2161, %v2193
        %v2226 = vadd.f32 %v2162, %v2194
        %v2227 = vadd.f32 %v2163, %v2195
        %v2228 = vadd.f32 %v2164, %v2196
        %v2229 = vadd.f32 %v2165, %v2197
        %v2230 = vadd.f32 %v2166, %v2198
        %v2231 = vadd.f32 %v2167, %v2199
        %v2232 = vadd.f32 %v2168, %v2200
        %v2233 = vadd.f32 %v2169, %v2201
        %2234 = vst [vmem:[%s352] sm:$0xff] %v2202
        %2235 = vst [vmem:[%s352 + $0x8] sm:$0xff] %v2203
        %2236 = vst [vmem:[%s352 + $0x10] sm:$0xff] %v2204
        %2237 = vst [vmem:[%s352 + $0x18] sm:$0xff] %v2205
        %2238 = vst [vmem:[%s352 + $0x20] sm:$0xff] %v2206
        %2239 = vst [vmem:[%s352 + $0x28] sm:$0xff] %v2207
        %2240 = vst [vmem:[%s352 + $0x30] sm:$0xff] %v2208
        %2241 = vst [vmem:[%s352 + $0x38] sm:$0xff] %v2209
        %2242 = vst [vmem:[%s352 + $0x40] sm:$0xff] %v2210
        %2243 = vst [vmem:[%s352 + $0x48] sm:$0xff] %v2211
        %2244 = vst [vmem:[%s352 + $0x50] sm:$0xff] %v2212
        %2245 = vst [vmem:[%s352 + $0x58] sm:$0xff] %v2213
        %2246 = vst [vmem:[%s352 + $0x60] sm:$0xff] %v2214
        %2247 = vst [vmem:[%s352 + $0x68] sm:$0xff] %v2215
        %2248 = vst [vmem:[%s352 + $0x70] sm:$0xff] %v2216
        %2249 = vst [vmem:[%s352 + $0x78] sm:$0xff] %v2217
        %2250 = vst [vmem:[%s352 + $0x80] sm:$0xff] %v2218
        %2251 = vst [vmem:[%s352 + $0x88] sm:$0xff] %v2219
        %2252 = vst [vmem:[%s352 + $0x90] sm:$0xff] %v2220
        %2253 = vst [vmem:[%s352 + $0x98] sm:$0xff] %v2221
        %2254 = vst [vmem:[%s352 + $0xa0] sm:$0xff] %v2222
        %2255 = vst [vmem:[%s352 + $0xa8] sm:$0xff] %v2223
        %2256 = vst [vmem:[%s352 + $0xb0] sm:$0xff] %v2224
        %2257 = vst [vmem:[%s352 + $0xb8] sm:$0xff] %v2225
        %2258 = vst [vmem:[%s352 + $0xc0] sm:$0xff] %v2226
        %2259 = vst [vmem:[%s352 + $0xc8] sm:$0xff] %v2227
        %2260 = vst [vmem:[%s352 + $0xd0] sm:$0xff] %v2228
        %2261 = vst [vmem:[%s352 + $0xd8] sm:$0xff] %v2229
        %2262 = vst [vmem:[%s352 + $0xe0] sm:$0xff] %v2230
        %2263 = vst [vmem:[%s352 + $0xe8] sm:$0xff] %v2231
        %2264 = vst [vmem:[%s352 + $0xf0] sm:$0xff] %v2232
        %2265 = vst [vmem:[%s352 + $0xf8] sm:$0xff] %v2233
        %s2266 = sand.u32 %s171, 1
        %s2267 = scalar_lea.sflag [#allocation4], %s2266
        %s2268 = sand.u32 %s171, 1
        %s2269 = smul.addr %s2268, 256
        %s2270 = scalar_lea.vmem [#allocation11], %s2269
        // Predicated region
        $region65: #{tpu_custom_call.1} parent=43 // pred_check
          %p2271 = pneg %p181
        $region66: #{tpu_custom_call.1} parent=43 // pred_check_branch
          %2273 = sbr.rel (%p2271) target = $region68
        $region67: #{tpu_custom_call.1} parent=43 // pred_region
          %s2274 = smul.u32 32, %s27
          %s2276 = ssub.s32 4096, 4096
          %2277 = vsyncadd %s2267, %s2276
          %s2278 = smul.addr %s2274, 128
          %s2279 = scalar_lea.hbm %s6, %s2278
          %s2280 = sshll.u32 %s2270, 4
          %s2281 = int_to_ptr.vmem [resolvable:$true] %s2280
          %2286 = dma.vmem_to_hbm [thread:$0]  %s2281, 4096, %s2279, %s2267, 128, 128, 8
        $region68: #{tpu_custom_call.1} parent=43 // pred_fallthru
          _
      $region44: #{tpu_custom_call.1} parent=5 // pred_fallthru
        _
      %p2287 = scmp.le.s32.totalorder 2, %s22
      // Predicated region
      $region69: #{tpu_custom_call.1} parent=5 // pred_check
        %p2288 = pneg %p2287
      $region70: #{tpu_custom_call.1} parent=5 // pred_check_branch
        %2290 = sbr.rel (%p2288) target = $region72
      $region71: #{tpu_custom_call.1} parent=5 // pred_region
        %s2291 = ssub.s32 %s22, 2
        // Predicated region
        $region73: #{tpu_custom_call.1} parent=71 // pred_check
          %p2292 = pneg %p187
        $region74: #{tpu_custom_call.1} parent=71 // pred_check_branch
          %2294 = sbr.rel (%p2292) target = $region76
        $region75: #{tpu_custom_call.1} parent=71 // pred_region
          %s2295 = sand.u32 %s172, 1
          %s2296 = scalar_lea.sflag [#allocation4], %s2295
          %s2297 = sand.u32 %s172, 1
          %s2298 = smul.addr %s2297, 256
          %s2299 = scalar_lea.vmem [#allocation11], %s2298
          %2300 = dma.done %s2296, 4096
        $region76: #{tpu_custom_call.1} parent=71 // pred_fallthru
          _
      $region72: #{tpu_custom_call.1} parent=5 // pred_fallthru
        _
    $region6: #{tpu_custom_call.1} parent=1 // loop_footer
      %s26 = sadd.s32 1, %s22
    $region7: #{tpu_custom_call.1} parent=1 // loop_footer_branch
      %21 = sbr.rel target = $region3
    $region8: #{tpu_custom_call.1} parent=1 // loop_exit
      _
    %2301 = vsyncpa [#allocation3], 1
    %s2302 = scalar_lea.sflag [#allocation3], 1
    %2303 = vsyncpa %s2302, 1
    %2304 = vsyncpa [#allocation6], 1
    %s2305 = scalar_lea.sflag [#allocation6], 1
    %2306 = vsyncpa %s2305, 1
    %2307 = vsyncpa [#allocation9], 1
    %2308 = vsyncpa [#allocation4], 1
    %s2309 = scalar_lea.sflag [#allocation4], 1
    %2310 = vsyncpa %s2309, 1

</llo_original>
